<compile_context>
chip_gen: v7x
topology: tpu7x:2x2x1
jax: 0.10.0
libtpu: 0.0.40
codegen_flags: <defaults>
</compile_context>

<pallas_src>
import functools

import jax
import jax.numpy as jnp
import numpy as np
from jax.experimental import pallas as pl
from jax.experimental.pallas import tpu as pltpu


def _sdpa_kernel(q_ref, k_ref, v_ref, mask_ref, out_ref, *attn_out,
                 inv_temper, mask_value, mxu_bf16):
    attn_ref = attn_out[0] if attn_out else None

    q = q_ref[...]                                    # (TB, TQ, D)
    k = k_ref[...]                                    # (TB, Lk, D)
    v = v_ref[...]                                    # (TB, Lk, D)

    # MXU operand dtype: bf16 when requested on the f32 path (f32 accumulate).
    op_dtype = jnp.bfloat16 if mxu_bf16 else q.dtype

    # Fold 1/temper into Q (TQ*D multiplies instead of TQ*Lk on the scores);
    # scale in f32 before the operand cast so it adds no extra rounding step.
    q = (q.astype(jnp.float32) * inv_temper).astype(op_dtype)
    k = k.astype(op_dtype)

    # scores = q @ k^T, contracting the last axes (no explicit transpose),
    # f32 accumulation on the MXU.
    scores = jnp.einsum("bqd,bkd->bqk", q, k,
                        preferred_element_type=jnp.float32)   # (TB, TQ, Lk) f32

    # masked_fill(mask, -inf) -> finite large-negative: identical softmax for
    # partially-masked rows, uniform (instead of NaN) for fully-masked rows.
    scores = jnp.where(mask_ref[...] != 0, jnp.float32(mask_value), scores)

    # Numerically-stable softmax in f32; reciprocal goes to the EUP slot.
    row_max = jnp.max(scores, axis=-1, keepdims=True)
    exps = jnp.exp(scores - row_max)
    denom = jnp.sum(exps, axis=-1, keepdims=True)
    attn = exps * pl.reciprocal(denom, approx=True)

    # Dropout: eval-mode semantics (identity).
    # TODO(synk): training-mode dropout (pltpu.prng_seed / prng_random_bits) omitted.

    # Cast once; reuse for both the attn writeback and the PV matmul.
    pv_dtype = op_dtype if mxu_bf16 else v.dtype
    attn_lo = attn.astype(pv_dtype)

    if attn_ref is not None:
        if attn_ref.dtype == attn_lo.dtype:
            attn_ref[...] = attn_lo
        else:
            attn_ref[...] = attn.astype(attn_ref.dtype)

    out = jnp.einsum("bqk,bkd->bqd", attn_lo, v.astype(pv_dtype),
                     preferred_element_type=jnp.float32)      # (TB, TQ, D) f32
    out_ref[...] = out.astype(out_ref.dtype)


def _vmem_budget():
    """Generation-aware VMEM budget (bytes) + cap for vmem_limit_bytes."""
    cap = None
    try:
        cap = int(pltpu.get_tpu_info().vmem_capacity_bytes)
    except Exception:
        cap = None
    if not cap or cap <= 0:
        cap = 64 * 2 ** 20          # conservative fallback: v7x physical VMEM
    budget = int(cap * 0.45)        # ~28 MiB on v7x, ~57 MiB on v5e/v6e
    limit_cap = min(int(cap * 0.75), budget + 20 * 2 ** 20)
    return budget, limit_cap


def _pick_tiles(B, Lq, Lk, D, in_itemsize, attn_itemsize, vmem_budget_bytes,
                want_attn):
    """Pick (TB, TQ): largest TQ first (MXU M-dim), then grow TB under budget."""

    def step_bytes(tb, tq):
        qb = 2 * tb * tq * D * in_itemsize           # double-buffered q in
        kv = 2 * 2 * tb * Lk * D * in_itemsize       # double-buffered k, v in
        mb = 2 * tb * tq * Lk * 1                    # double-buffered int8 mask
        ob = 2 * tb * tq * D * in_itemsize           # double-buffered out
        ab = (2 * tb * tq * Lk * attn_itemsize) if want_attn else 0
        # In-kernel f32 temporaries: scores, exps, attn (+ f32 out before cast).
        tmp = 3 * tb * tq * Lk * 4 + tb * tq * D * 4
        return qb + kv + mb + ob + ab + tmp

    def tq_cands():
        cands = [t for t in (1024, 512, 256, 128, 64, 32)
                 if t <= Lq and Lq % t == 0]
        if Lq not in cands:
            cands.append(Lq)                         # full Lq is always legal
        return sorted(set(cands), reverse=True)      # TQ-first: biggest first

    def tb_cands():
        return [t for t in (16, 8, 4, 2, 1) if t <= B and B % t == 0] or [1]

    # Secure the largest TQ that fits with TB=1 (MXU M-dim), then grow TB.
    cands = tq_cands()
    best_tq = None
    for tq in cands:
        if step_bytes(1, tq) <= vmem_budget_bytes:
            best_tq = tq
            break
    if best_tq is None:
        # Nothing fits the budget even at TB=1 with the smallest TQ.
        # TODO(synk): Lk-tiled online-softmax (flash-style) path for long Lk.
        best_tq = cands[-1]

    best_tb = 1
    for tb in sorted(tb_cands()):
        if step_bytes(tb, best_tq) <= vmem_budget_bytes:
            best_tb = tb
    return best_tb, best_tq, step_bytes(best_tb, best_tq)


def scaled_dot_product_attention(q, k, v, attn_mask, d_model, attn_dropout=0.1,
                                 *, attn_dtype=None, return_attn=True,
                                 mxu_bf16=False):
    """Pallas equivalent of ScaledDotProductAttention.forward (eval mode).

    q, k, v: (n_head*batch, len, d_model/n_head); attn_mask: (n_head*batch,
    len_q, len_k) with truthy == masked. Returns (output, attn); `attn` is
    None when return_attn=False. Softmax/accumulation run in f32 inside the
    kernel regardless of input dtype. `attn_dtype` (default q.dtype) controls
    the attn writeback dtype; `mxu_bf16=True` casts the matmul operands to
    bf16 (f32 accumulation) on the f32 path.
    """
    B, Lq, D = q.shape
    Lk = k.shape[1]
    assert k.shape == (B, Lk, D) and v.shape == (B, Lk, D)
    assert attn_mask.shape == (B, Lq, Lk)

    temper = float(np.power(d_model, 0.5))
    if attn_dtype is None:
        attn_dtype = q.dtype
    mask_i8 = attn_mask.astype(jnp.int8)   # 1 byte/elem of mask DMA traffic

    in_itemsize = jnp.dtype(q.dtype).itemsize
    attn_itemsize = jnp.dtype(attn_dtype).itemsize

    vmem_budget, vmem_limit_cap = _vmem_budget()
    TB, TQ, step_bytes = _pick_tiles(B, Lq, Lk, D, in_itemsize, attn_itemsize,
                                     vmem_budget, return_attn)
    vmem_limit = int(min(vmem_limit_cap,
                         max(16 * 2 ** 20, step_bytes + 8 * 2 ** 20)))

    kernel = functools.partial(
        _sdpa_kernel, inv_temper=1.0 / temper, mask_value=-1e30,
        mxu_bf16=bool(mxu_bf16))

    if return_attn:
        out_shape = (jax.ShapeDtypeStruct((B, Lq, D), q.dtype),
                     jax.ShapeDtypeStruct((B, Lq, Lk), attn_dtype))
        out_specs = (pl.BlockSpec((TB, TQ, D), lambda b, i: (b, i, 0)),
                     pl.BlockSpec((TB, TQ, Lk), lambda b, i: (b, i, 0)))
    else:
        out_shape = jax.ShapeDtypeStruct((B, Lq, D), q.dtype)
        out_specs = pl.BlockSpec((TB, TQ, D), lambda b, i: (b, i, 0))

    result = pl.pallas_call(
        kernel,
        out_shape=out_shape,
        grid_spec=pltpu.PrefetchScalarGridSpec(
            num_scalar_prefetch=0,
            grid=(B // TB, Lq // TQ),   # Lq inner: K/V blocks stay VMEM-resident
            in_specs=[
                pl.BlockSpec((TB, TQ, D), lambda b, i: (b, i, 0)),
                pl.BlockSpec((TB, Lk, D), lambda b, i: (b, 0, 0)),
                pl.BlockSpec((TB, Lk, D), lambda b, i: (b, 0, 0)),
                pl.BlockSpec((TB, TQ, Lk), lambda b, i: (b, i, 0)),
            ],
            out_specs=out_specs,
        ),
        compiler_params=pltpu.CompilerParams(
            # Batch axis parallel (megacore sharding on v7x); inner Lq axis
            # arbitrary so the two cores never re-DMA the same K/V blocks.
            dimension_semantics=("parallel", "arbitrary"),
            vmem_limit_bytes=vmem_limit),
    )(q, k, v, mask_i8)

    if return_attn:
        out, attn = result
        return out, attn
    return result, None


if __name__ == "__main__":
    # n_head=4, batch=2 -> B=8; len_q=len_k=8; d_model/n_head = 32
    B, L, D = 8, 8, 32
    d_model = D  # only used for temper = sqrt(d_model)

    key = jax.random.PRNGKey(0)
    kq, kk, kv, km = jax.random.split(key, 4)
    q = jax.random.normal(kq, (B, L, D), dtype=jnp.float32)
    k = jax.random.normal(kk, (B, L, D), dtype=jnp.float32)
    v = jax.random.normal(kv, (B, L, D), dtype=jnp.float32)
    attn_mask = jax.random.bernoulli(km, 0.2, (B, L, L))
    # Keep one unmasked key per row so the -inf reference below stays NaN-free
    # (the kernel itself is NaN-safe via the finite -1e30 fill).
    attn_mask = attn_mask.at[:, :, 0].set(False)

    out, attn = scaled_dot_product_attention(q, k, v, attn_mask, d_model)
    out, attn = jax.block_until_ready((out, attn))

    # Reference in plain JAX (eval-mode dropout == identity).
    temper = float(np.power(d_model, 0.5))
    scores = jnp.einsum("bqd,bkd->bqk", q, k) / temper
    scores = jnp.where(attn_mask, -jnp.inf, scores)
    attn_expect = jax.nn.softmax(scores, axis=-1)
    out_expect = jnp.einsum("bqk,bkd->bqd", attn_expect, v)

    # Tolerance covers the EUP approximate reciprocal (~1e-4 relative).
    np.testing.assert_allclose(np.asarray(attn), np.asarray(attn_expect),
                               rtol=2e-3, atol=2e-3)
    np.testing.assert_allclose(np.asarray(out), np.asarray(out_expect),
                               rtol=2e-3, atol=2e-3)

    # out-only path: skips the dominant (B,Lq,Lk) attn HBM writeback.
    out_only, no_attn = scaled_dot_product_attention(
        q, k, v, attn_mask, d_model, return_attn=False)
    out_only = jax.block_until_ready(out_only)
    assert no_attn is None
    np.testing.assert_allclose(np.asarray(out_only), np.asarray(out_expect),
                               rtol=2e-3, atol=2e-3)

    # bf16 MXU operands on the f32 path + bf16 attn writeback (looser tolerance).
    out_fast, attn_fast = scaled_dot_product_attention(
        q, k, v, attn_mask, d_model, attn_dtype=jnp.bfloat16, mxu_bf16=True)
    out_fast, attn_fast = jax.block_until_ready((out_fast, attn_fast))
    np.testing.assert_allclose(np.asarray(out_fast), np.asarray(out_expect),
                               rtol=5e-2, atol=5e-2)
    np.testing.assert_allclose(np.asarray(attn_fast.astype(jnp.float32)),
                               np.asarray(attn_expect), rtol=5e-2, atol=5e-2)

    # bf16 input path (f32 softmax/accumulation inside the kernel).
    out_bf, attn_bf = scaled_dot_product_attention(
        q.astype(jnp.bfloat16), k.astype(jnp.bfloat16), v.astype(jnp.bfloat16),
        attn_mask, d_model)
    out_bf, attn_bf = jax.block_until_ready((out_bf, attn_bf))
    np.testing.assert_allclose(np.asarray(out_bf.astype(jnp.float32)),
                               np.asarray(out_expect), rtol=1e-1, atol=1e-1)

    print("KERNEL_OK")
</pallas_src>

<mosaic_0001>
module attributes {stable_mosaic.version = 11 : i64} {
  func.func @_sdpa_kernel(%arg0: i32, %arg1: i32, %arg2: memref<8x8x32xf32, #tpu.memory_space<vmem>>, %arg3: memref<8x8x32xf32, #tpu.memory_space<vmem>>, %arg4: memref<8x8x32xf32, #tpu.memory_space<vmem>>, %arg5: memref<8x8x8xi8, #tpu.memory_space<vmem>>, %arg6: memref<8x8x32xf32, #tpu.memory_space<vmem>>, %arg7: memref<8x8x8xf32, #tpu.memory_space<vmem>>) attributes {dimension_semantics = [#tpu.dimension_semantics<parallel>, #tpu.dimension_semantics<arbitrary>], iteration_bounds = array<i64: 1, 1>, scalar_prefetch = 0 : i64, scratch_operands = 0 : i64, tpu.core_type = #tpu.core_type<tc>, window_params = [{transform_indices = @transform_0, window_bounds = array<i64: 8, 8, 32>}, {transform_indices = @transform_1, window_bounds = array<i64: 8, 8, 32>}, {transform_indices = @transform_2, window_bounds = array<i64: 8, 8, 32>}, {transform_indices = @transform_3, window_bounds = array<i64: 8, 8, 8>}, {transform_indices = @transform_4, window_bounds = array<i64: 8, 8, 32>}, {transform_indices = @transform_5, window_bounds = array<i64: 8, 8, 8>}]} {
    %c0 = arith.constant 0 : index
    %c0_0 = arith.constant 0 : index
    %c0_1 = arith.constant 0 : index
    %0 = vector.load %arg2[%c0, %c0_0, %c0_1] : memref<8x8x32xf32, #tpu.memory_space<vmem>>, vector<8x8x32xf32>
    %c0_2 = arith.constant 0 : index
    %c0_3 = arith.constant 0 : index
    %c0_4 = arith.constant 0 : index
    %1 = vector.load %arg3[%c0_2, %c0_3, %c0_4] : memref<8x8x32xf32, #tpu.memory_space<vmem>>, vector<8x8x32xf32>
    %c0_5 = arith.constant 0 : index
    %c0_6 = arith.constant 0 : index
    %c0_7 = arith.constant 0 : index
    %2 = vector.load %arg4[%c0_5, %c0_6, %c0_7] : memref<8x8x32xf32, #tpu.memory_space<vmem>>, vector<8x8x32xf32>
    %cst = arith.constant 0.176776692 : f32
    %3 = vector.broadcast %cst : f32 to vector<8x8x32xf32>
    %4 = arith.mulf %0, %3 : vector<8x8x32xf32>
    "tpu.trace_start"() <{level = 10 : i32, message = "bqd,bkd->bqk"}> : () -> ()
    %cst_8 = arith.constant dense<0.000000e+00> : vector<8x8x8xf32>
    %5 = tpu.matmul %4, %1, %cst_8 {dimension_numbers = #tpu.dot_dimension_numbers<[2], [2], [1], [1], [0, 0, 0, 1, 1, 1], [0], [0]>} : vector<8x8x32xf32>, vector<8x8x32xf32>, vector<8x8x8xf32> -> vector<8x8x8xf32>
    "tpu.trace_stop"() : () -> ()
    %c0_9 = arith.constant 0 : index
    %c0_10 = arith.constant 0 : index
    %c0_11 = arith.constant 0 : index
    %6 = vector.load %arg5[%c0_9, %c0_10, %c0_11] : memref<8x8x8xi8, #tpu.memory_space<vmem>>, vector<8x8x8xi8>
    %c0_i8 = arith.constant 0 : i8
    %7 = vector.broadcast %c0_i8 : i8 to vector<8x8x8xi8>
    %8 = arith.cmpi ne, %6, %7 : vector<8x8x8xi8>
    %cst_12 = arith.constant -1.000000e+30 : f32
    %9 = vector.broadcast %cst_12 : f32 to vector<8x8x8xf32>
    %10 = arith.select %8, %9, %5 : vector<8x8x8xi1>, vector<8x8x8xf32>
    %cst_13 = arith.constant dense<0xFF800000> : vector<8x8xf32>
    %11 = vector.multi_reduction <maximumf>, %10, %cst_13 [2] : vector<8x8x8xf32> to vector<8x8xf32>
    %12 = vector.shape_cast %11 : vector<8x8xf32> to vector<8x8x1xf32>
    %13 = vector.broadcast %12 : vector<8x8x1xf32> to vector<8x8x8xf32>
    %14 = arith.subf %10, %13 : vector<8x8x8xf32>
    %15 = math.exp %14 : vector<8x8x8xf32>
    %cst_14 = arith.constant dense<0.000000e+00> : vector<8x8xf32>
    %16 = vector.multi_reduction <add>, %15, %cst_14 [2] : vector<8x8x8xf32> to vector<8x8xf32>
    %17 = vector.shape_cast %16 : vector<8x8xf32> to vector<8x8x1xf32>
    %18 = tpu.reciprocal %17 {approx = true} : vector<8x8x1xf32> -> vector<8x8x1xf32>
    %19 = vector.broadcast %18 : vector<8x8x1xf32> to vector<8x8x8xf32>
    %20 = arith.mulf %15, %19 : vector<8x8x8xf32>
    %c0_15 = arith.constant 0 : index
    %c0_16 = arith.constant 0 : index
    %c0_17 = arith.constant 0 : index
    %21 = vector.load %arg7[%c0_15, %c0_16, %c0_17] : memref<8x8x8xf32, #tpu.memory_space<vmem>>, vector<8x8x8xf32>
    tpu.vector_store %arg7[%c0_15, %c0_16, %c0_17], %20 {strides = array<i32>} : memref<8x8x8xf32, #tpu.memory_space<vmem>>, vector<8x8x8xf32>,
    "tpu.trace_start"() <{level = 10 : i32, message = "bqk,bkd->bqd"}> : () -> ()
    %cst_18 = arith.constant dense<0.000000e+00> : vector<8x8x32xf32>
    %22 = tpu.matmul %20, %2, %cst_18 {dimension_numbers = #tpu.dot_dimension_numbers<[2], [1], [1], [2], [0, 0, 0, 1, 1, 2], [0], [0]>} : vector<8x8x8xf32>, vector<8x8x32xf32>, vector<8x8x32xf32> -> vector<8x8x32xf32>
    "tpu.trace_stop"() : () -> ()
    %c0_19 = arith.constant 0 : index
    %c0_20 = arith.constant 0 : index
    %c0_21 = arith.constant 0 : index
    %23 = vector.load %arg6[%c0_19, %c0_20, %c0_21] : memref<8x8x32xf32, #tpu.memory_space<vmem>>, vector<8x8x32xf32>
    tpu.vector_store %arg6[%c0_19, %c0_20, %c0_21], %22 {strides = array<i32>} : memref<8x8x32xf32, #tpu.memory_space<vmem>>, vector<8x8x32xf32>,
    return
  }
  func.func @transform_0(%arg0: i32, %arg1: i32) -> (i32, i32, i32) {
    %c0_i32 = arith.constant 0 : i32
    %c0_i32_0 = arith.constant 0 : i32
    return %arg0, %arg1, %c0_i32 : i32, i32, i32
  }
  func.func @transform_1(%arg0: i32, %arg1: i32) -> (i32, i32, i32) {
    %c0_i32 = arith.constant 0 : i32
    %c0_i32_0 = arith.constant 0 : i32
    %c0_i32_1 = arith.constant 0 : i32
    return %arg0, %c0_i32, %c0_i32_0 : i32, i32, i32
  }
  func.func @transform_2(%arg0: i32, %arg1: i32) -> (i32, i32, i32) {
    %c0_i32 = arith.constant 0 : i32
    %c0_i32_0 = arith.constant 0 : i32
    %c0_i32_1 = arith.constant 0 : i32
    return %arg0, %c0_i32, %c0_i32_0 : i32, i32, i32
  }
  func.func @transform_3(%arg0: i32, %arg1: i32) -> (i32, i32, i32) {
    %c0_i32 = arith.constant 0 : i32
    %c0_i32_0 = arith.constant 0 : i32
    return %arg0, %arg1, %c0_i32 : i32, i32, i32
  }
  func.func @transform_4(%arg0: i32, %arg1: i32) -> (i32, i32, i32) {
    %c0_i32 = arith.constant 0 : i32
    %c0_i32_0 = arith.constant 0 : i32
    return %arg0, %arg1, %c0_i32 : i32, i32, i32
  }
  func.func @transform_5(%arg0: i32, %arg1: i32) -> (i32, i32, i32) {
    %c0_i32 = arith.constant 0 : i32
    %c0_i32_0 = arith.constant 0 : i32
    return %arg0, %arg1, %c0_i32 : i32, i32, i32
  }
}

</mosaic_0001>

<llo_original>
// kernel: tpu_custom_call.1
$region0: #{tpu_custom_call.1}
  #allocation0 [shape = 'u32[]', space=smem, size = 0x4, offset = 0x4, fixed_abs, tag = 'smem constant byte address 0x4 - core index']
  #allocation1 [shape = 'u32[144,128]{1,0:T(1,128)}', space=vmem, size = 0x12000, scoped, tag = 'internal scratch']
  %s0 = inlined_call_operand.hbm [shape: f32[8,8,32], index: 0, kind: input, shape index: {}]
  %s1 = inlined_call_operand.hbm [shape: f32[8,8,32], index: 1, kind: input, shape index: {}]
  %s2 = inlined_call_operand.hbm [shape: f32[8,8,32], index: 2, kind: input, shape index: {}]
  %s3 = inlined_call_operand.hbm [shape: s8[8,8,8], index: 3, kind: input, shape index: {}]
  %s4 = inlined_call_operand.hbm [shape: f32[8,8,32], index: 4, kind: output, shape index: {0}]
  %s5 = inlined_call_operand.hbm [shape: f32[8,8,8], index: 5, kind: output, shape index: {1}]
  %6 = xla_tuple %s4, %s5
  %s7 = sld [smem:[#allocation0]]
  $region50: #{tpu_custom_call.1} parent=0
    _
  %s9 = ssub.s32 1, %s7
  %s10 = scalar_select 0, %s9, %s7
  $region1: #{tpu_custom_call.1} parent=0
    #allocation2 [shape = 'u8[32768]{0}', space=vmem, size = 0x8000, scoped, tag = 'input window, operand 0, single buffered']
    #allocation3 [shape = 's32[1]{0}', space=sflag, size = 0x4, scoped, tag = 'scoped memory for tpu_custom_call.1']
    #allocation4 [shape = 's32[1]{0}', space=sflag, size = 0x4, scoped, tag = 'scoped memory for tpu_custom_call.1']
    #allocation5 [shape = 'u8[32768]{0}', space=vmem, size = 0x8000, scoped, tag = 'input window, operand 1, single buffered']
    #allocation6 [shape = 's32[1]{0}', space=sflag, size = 0x4, scoped, tag = 'scoped memory for tpu_custom_call.1']
    #allocation7 [shape = 'u8[32768]{0}', space=vmem, size = 0x8000, scoped, tag = 'input window, operand 2, single buffered']
    #allocation8 [shape = 'u8[8192]{0}', space=vmem, size = 0x2000, scoped, tag = 'input window, operand 3, single buffered']
    #allocation9 [shape = 's32[1]{0}', space=sflag, size = 0x4, scoped, tag = 'scoped memory for tpu_custom_call.1']
    #allocation10 [shape = 'u8[32768]{0}', space=vmem, size = 0x8000, scoped, tag = 'output window, operand 0, single buffered']
    #allocation11 [shape = 'u8[32768]{0}', space=vmem, size = 0x8000, scoped, tag = 'output window, operand 1, single buffered']
    #allocation12 [shape = 's32[1]{0}', space=sflag, size = 0x4, scoped, tag = 'scoped memory for tpu_custom_call.1']
    %11 = vsyncpa [#allocation3], 0
    %12 = vsyncpa [#allocation6], 0
    %13 = vsyncpa [#allocation9], 0
    %14 = vsyncpa [#allocation4], 0
    %15 = vsyncpa [#allocation12], 0
    // Predicated region
    $region2: #{tpu_custom_call.1} parent=1 // pred_check
      _
    $region3: #{tpu_custom_call.1} parent=1 // pred_check_branch
      %17 = sbr.rel (0) target = $region5
    $region4: #{tpu_custom_call.1} parent=1 // pred_region
      %s19 = ssub.s32 1024, 1024
      %20 = vsyncadd [#allocation3], %s19
      %s21 = sshll.u32 [#allocation2], 4
      %s22 = int_to_ptr.vmem [resolvable:$true] %s21
      %27 = dma.hbm_to_vmem [thread:$0]  %s0, 1024, %s22, [#allocation3], 128, 128, 8
    $region5: #{tpu_custom_call.1} parent=1 // pred_fallthru
      _
    // Predicated region
    $region6: #{tpu_custom_call.1} parent=1 // pred_check
      _
    $region7: #{tpu_custom_call.1} parent=1 // pred_check_branch
      %29 = sbr.rel (0) target = $region9
    $region8: #{tpu_custom_call.1} parent=1 // pred_region
      %s31 = ssub.s32 1024, 1024
      %32 = vsyncadd [#allocation6], %s31
      %s33 = sshll.u32 [#allocation5], 4
      %s34 = int_to_ptr.vmem [resolvable:$true] %s33
      %39 = dma.hbm_to_vmem [thread:$0]  %s1, 1024, %s34, [#allocation6], 128, 128, 8
    $region9: #{tpu_custom_call.1} parent=1 // pred_fallthru
      _
    // Predicated region
    $region10: #{tpu_custom_call.1} parent=1 // pred_check
      _
    $region11: #{tpu_custom_call.1} parent=1 // pred_check_branch
      %41 = sbr.rel (0) target = $region13
    $region12: #{tpu_custom_call.1} parent=1 // pred_region
      %s43 = ssub.s32 1024, 1024
      %44 = vsyncadd [#allocation6], %s43
      %s45 = sshll.u32 [#allocation7], 4
      %s46 = int_to_ptr.vmem [resolvable:$true] %s45
      %51 = dma.hbm_to_vmem [thread:$0]  %s2, 1024, %s46, [#allocation6], 128, 128, 8
    $region13: #{tpu_custom_call.1} parent=1 // pred_fallthru
      _
    // Predicated region
    $region14: #{tpu_custom_call.1} parent=1 // pred_check
      _
    $region15: #{tpu_custom_call.1} parent=1 // pred_check_branch
      %53 = sbr.rel (0) target = $region17
    $region16: #{tpu_custom_call.1} parent=1 // pred_region
      %s55 = ssub.s32 256, 256
      %56 = vsyncadd [#allocation9], %s55
      %s57 = sshll.u32 [#allocation8], 4
      %s58 = int_to_ptr.vmem [resolvable:$true] %s57
      %63 = dma.hbm_to_vmem [thread:$0]  %s3, 256, %s58, [#allocation9], 32, 32, 2
    $region17: #{tpu_custom_call.1} parent=1 // pred_fallthru
      _
    // Predicated region
    $region18: #{tpu_custom_call.1} parent=1 // pred_check
      _
    $region19: #{tpu_custom_call.1} parent=1 // pred_check_branch
      %65 = sbr.rel (0) target = $region21
    $region20: #{tpu_custom_call.1} parent=1 // pred_region
      %66 = dma.done [#allocation3], 1024
    $region21: #{tpu_custom_call.1} parent=1 // pred_fallthru
      _
    // Predicated region
    $region22: #{tpu_custom_call.1} parent=1 // pred_check
      _
    $region23: #{tpu_custom_call.1} parent=1 // pred_check_branch
      %68 = sbr.rel (0) target = $region25
    $region24: #{tpu_custom_call.1} parent=1 // pred_region
      %69 = dma.done [#allocation6], 1024
    $region25: #{tpu_custom_call.1} parent=1 // pred_fallthru
      _
    // Predicated region
    $region26: #{tpu_custom_call.1} parent=1 // pred_check
      _
    $region27: #{tpu_custom_call.1} parent=1 // pred_check_branch
      %71 = sbr.rel (0) target = $region29
    $region28: #{tpu_custom_call.1} parent=1 // pred_region
      %72 = dma.done [#allocation6], 1024
    $region29: #{tpu_custom_call.1} parent=1 // pred_fallthru
      _
    // Predicated region
    $region30: #{tpu_custom_call.1} parent=1 // pred_check
      _
    $region31: #{tpu_custom_call.1} parent=1 // pred_check_branch
      %74 = sbr.rel (0) target = $region33
    $region32: #{tpu_custom_call.1} parent=1 // pred_region
      %75 = dma.done [#allocation9], 256
    $region33: #{tpu_custom_call.1} parent=1 // pred_fallthru
      _
    %v78 = vld [vmem:[#allocation2] sm:$0xff]
    %v79 = vld [vmem:[#allocation2 + $0x8] sm:$0xff]
    %v80 = vld [vmem:[#allocation2 + $0x10] sm:$0xff]
    %v81 = vld [vmem:[#allocation2 + $0x18] sm:$0xff]
    %v82 = vld [vmem:[#allocation2 + $0x20] sm:$0xff]
    %v83 = vld [vmem:[#allocation2 + $0x28] sm:$0xff]
    %v84 = vld [vmem:[#allocation2 + $0x30] sm:$0xff]
    %v85 = vld [vmem:[#allocation2 + $0x38] sm:$0xff]
    %v86 = vld [vmem:[#allocation5] sm:$0xff]
    %v87 = vld [vmem:[#allocation5 + $0x8] sm:$0xff]
    %v88 = vld [vmem:[#allocation5 + $0x10] sm:$0xff]
    %v89 = vld [vmem:[#allocation5 + $0x18] sm:$0xff]
    %v90 = vld [vmem:[#allocation5 + $0x20] sm:$0xff]
    %v91 = vld [vmem:[#allocation5 + $0x28] sm:$0xff]
    %v92 = vld [vmem:[#allocation5 + $0x30] sm:$0xff]
    %v93 = vld [vmem:[#allocation5 + $0x38] sm:$0xff]
    %v94 = vld [vmem:[#allocation7] sm:$0xff]
    %v95 = vld [vmem:[#allocation7 + $0x8] sm:$0xff]
    %v96 = vld [vmem:[#allocation7 + $0x10] sm:$0xff]
    %v97 = vld [vmem:[#allocation7 + $0x18] sm:$0xff]
    %v98 = vld [vmem:[#allocation7 + $0x20] sm:$0xff]
    %v99 = vld [vmem:[#allocation7 + $0x28] sm:$0xff]
    %v100 = vld [vmem:[#allocation7 + $0x30] sm:$0xff]
    %v101 = vld [vmem:[#allocation7 + $0x38] sm:$0xff]
    %v102 = vmul.f32 %v78, 0.17677669
    %v103 = vmul.f32 %v79, 0.17677669
    %v104 = vmul.f32 %v80, 0.17677669
    %v105 = vmul.f32 %v81, 0.17677669
    %v106 = vmul.f32 %v82, 0.17677669
    %v107 = vmul.f32 %v83, 0.17677669
    %v108 = vmul.f32 %v84, 0.17677669
    %v109 = vmul.f32 %v85, 0.17677669
    %vm110 = vcmask 261120
    %v112 = vsel %vm110, %v102, 0
    %v115 = vsel %vm110, %v86, 0
    %117 = vmatprep.subr.mxu0 0.0
    %118 = vmatpush1.xpose.msra.mxu0 %v115
    %119 = vmatprep.subr.mxu0 0.0
    %120 = vmatpush1.xpose.msra.mxu0 0.0
    %121 = vmatprep.subr.mxu0 0.0
    %122 = vmatpush1.xpose.msra.mxu0 0.0
    %123 = vmatprep.subr.mxu0 0.0
    %124 = vmatpush1.xpose.msra.mxu0 0.0
    %125 = vmatprep.subr.mxu0 0.0
    %126 = vmatpush1.xpose.msra.mxu0 0.0
    %127 = vmatprep.subr.mxu0 0.0
    %128 = vmatpush1.xpose.msra.mxu0 0.0
    %129 = vmatprep.subr.mxu0 0.0
    %130 = vmatpush1.xpose.msra.mxu0 0.0
    %131 = vmatprep.subr.mxu0 0.0
    %132 = vmatpush1.xpose.msra.mxu0 0.0
    %133 = vmatprep.subr.mxu0 0.0
    %134 = vmatpush1.xpose.msra.mxu0 0.0
    %135 = vmatprep.subr.mxu0 0.0
    %136 = vmatpush1.xpose.msra.mxu0 0.0
    %137 = vmatprep.subr.mxu0 0.0
    %138 = vmatpush1.xpose.msra.mxu0 0.0
    %139 = vmatprep.subr.mxu0 0.0
    %140 = vmatpush1.xpose.msra.mxu0 0.0
    %141 = vmatprep.subr.mxu0 0.0
    %142 = vmatpush1.xpose.msra.mxu0 0.0
    %143 = vmatprep.subr.mxu0 0.0
    %144 = vmatpush1.xpose.msra.mxu0 0.0
    %145 = vmatprep.subr.mxu0 0.0
    %146 = vmatpush1.xpose.msra.mxu0 0.0
    %147 = vmatprep.subr.mxu0 0.0
    %148 = vmatpush1.xpose.msra.mxu0 0.0
    %149 = vmatprep.subr.mxu0 0.0
    %150 = vmatpush1.xpose.msra.mxu0 0.0
    %151 = vmatprep.subr.mxu0 0.0
    %152 = vmatpush1.xpose.msra.mxu0 0.0
    %153 = vmatprep.subr.mxu0 0.0
    %154 = vmatpush1.xpose.msra.mxu0 0.0
    %155 = vmatprep.subr.mxu0 0.0
    %156 = vmatpush1.xpose.msra.mxu0 0.0
    %157 = vmatprep.subr.mxu0 0.0
    %158 = vmatpush1.xpose.msra.mxu0 0.0
    %159 = vmatprep.subr.mxu0 0.0
    %160 = vmatpush1.xpose.msra.mxu0 0.0
    %161 = vmatprep.subr.mxu0 0.0
    %162 = vmatpush1.xpose.msra.mxu0 0.0
    %163 = vmatprep.subr.mxu0 0.0
    %164 = vmatpush1.xpose.msra.mxu0 0.0
    %165 = vmatprep.subr.mxu0 0.0
    %166 = vmatpush1.xpose.msra.mxu0 0.0
    %167 = vmatprep.subr.mxu0 0.0
    %168 = vmatpush1.xpose.msra.mxu0 0.0
    %169 = vmatprep.subr.mxu0 0.0
    %170 = vmatpush1.xpose.msra.mxu0 0.0
    %171 = vmatprep.subr.mxu0 0.0
    %172 = vmatpush1.xpose.msra.mxu0 0.0
    %173 = vmatprep.subr.mxu0 0.0
    %174 = vmatpush1.xpose.msra.mxu0 0.0
    %175 = vmatprep.subr.mxu0 0.0
    %176 = vmatpush1.xpose.msra.mxu0 0.0
    %177 = vmatprep.subr.mxu0 0.0
    %178 = vmatpush1.xpose.msra.mxu0 0.0
    %179 = vmatprep.subr.mxu0 0.0
    %180 = vmatpush1.xpose.msra.mxu0 0.0
    %181 = vmatprep.mubr.f32.mxu0 0.0
    %182 = vmatmul.mubr.f32.gmra.mrb[0].mxu0 %v112
    %v183 = vpop.f32.mrb[0].mxu0
    %v184 = vadd.f32 0.0, %v183
    %v185 = vpop.f32.mrb[0].mxu0
    %186 = vdwg.mxu0
    %v188 = vsel %vm110, %v103, 0
    %v191 = vsel %vm110, %v87, 0
    %193 = vmatprep.subr.mxu0 0.0
    %194 = vmatpush1.xpose.msra.mxu0 %v191
    %195 = vmatprep.subr.mxu0 0.0
    %196 = vmatpush1.xpose.msra.mxu0 0.0
    %197 = vmatprep.subr.mxu0 0.0
    %198 = vmatpush1.xpose.msra.mxu0 0.0
    %199 = vmatprep.subr.mxu0 0.0
    %200 = vmatpush1.xpose.msra.mxu0 0.0
    %201 = vmatprep.subr.mxu0 0.0
    %202 = vmatpush1.xpose.msra.mxu0 0.0
    %203 = vmatprep.subr.mxu0 0.0
    %204 = vmatpush1.xpose.msra.mxu0 0.0
    %205 = vmatprep.subr.mxu0 0.0
    %206 = vmatpush1.xpose.msra.mxu0 0.0
    %207 = vmatprep.subr.mxu0 0.0
    %208 = vmatpush1.xpose.msra.mxu0 0.0
    %209 = vmatprep.subr.mxu0 0.0
    %210 = vmatpush1.xpose.msra.mxu0 0.0
    %211 = vmatprep.subr.mxu0 0.0
    %212 = vmatpush1.xpose.msra.mxu0 0.0
    %213 = vmatprep.subr.mxu0 0.0
    %214 = vmatpush1.xpose.msra.mxu0 0.0
    %215 = vmatprep.subr.mxu0 0.0
    %216 = vmatpush1.xpose.msra.mxu0 0.0
    %217 = vmatprep.subr.mxu0 0.0
    %218 = vmatpush1.xpose.msra.mxu0 0.0
    %219 = vmatprep.subr.mxu0 0.0
    %220 = vmatpush1.xpose.msra.mxu0 0.0
    %221 = vmatprep.subr.mxu0 0.0
    %222 = vmatpush1.xpose.msra.mxu0 0.0
    %223 = vmatprep.subr.mxu0 0.0
    %224 = vmatpush1.xpose.msra.mxu0 0.0
    %225 = vmatprep.subr.mxu0 0.0
    %226 = vmatpush1.xpose.msra.mxu0 0.0
    %227 = vmatprep.subr.mxu0 0.0
    %228 = vmatpush1.xpose.msra.mxu0 0.0
    %229 = vmatprep.subr.mxu0 0.0
    %230 = vmatpush1.xpose.msra.mxu0 0.0
    %231 = vmatprep.subr.mxu0 0.0
    %232 = vmatpush1.xpose.msra.mxu0 0.0
    %233 = vmatprep.subr.mxu0 0.0
    %234 = vmatpush1.xpose.msra.mxu0 0.0
    %235 = vmatprep.subr.mxu0 0.0
    %236 = vmatpush1.xpose.msra.mxu0 0.0
    %237 = vmatprep.subr.mxu0 0.0
    %238 = vmatpush1.xpose.msra.mxu0 0.0
    %239 = vmatprep.subr.mxu0 0.0
    %240 = vmatpush1.xpose.msra.mxu0 0.0
    %241 = vmatprep.subr.mxu0 0.0
    %242 = vmatpush1.xpose.msra.mxu0 0.0
    %243 = vmatprep.subr.mxu0 0.0
    %244 = vmatpush1.xpose.msra.mxu0 0.0
    %245 = vmatprep.subr.mxu0 0.0
    %246 = vmatpush1.xpose.msra.mxu0 0.0
    %247 = vmatprep.subr.mxu0 0.0
    %248 = vmatpush1.xpose.msra.mxu0 0.0
    %249 = vmatprep.subr.mxu0 0.0
    %250 = vmatpush1.xpose.msra.mxu0 0.0
    %251 = vmatprep.subr.mxu0 0.0
    %252 = vmatpush1.xpose.msra.mxu0 0.0
    %253 = vmatprep.subr.mxu0 0.0
    %254 = vmatpush1.xpose.msra.mxu0 0.0
    %255 = vmatprep.subr.mxu0 0.0
    %256 = vmatpush1.xpose.msra.mxu0 0.0
    %257 = vmatprep.mubr.f32.mxu0 0.0
    %258 = vmatmul.mubr.f32.gmra.mrb[0].mxu0 %v188
    %v259 = vpop.f32.mrb[0].mxu0
    %v260 = vadd.f32 0.0, %v259
    %v261 = vpop.f32.mrb[0].mxu0
    %262 = vdwg.mxu0
    %v264 = vsel %vm110, %v104, 0
    %v267 = vsel %vm110, %v88, 0
    %269 = vmatprep.subr.mxu0 0.0
    %270 = vmatpush1.xpose.msra.mxu0 %v267
    %271 = vmatprep.subr.mxu0 0.0
    %272 = vmatpush1.xpose.msra.mxu0 0.0
    %273 = vmatprep.subr.mxu0 0.0
    %274 = vmatpush1.xpose.msra.mxu0 0.0
    %275 = vmatprep.subr.mxu0 0.0
    %276 = vmatpush1.xpose.msra.mxu0 0.0
    %277 = vmatprep.subr.mxu0 0.0
    %278 = vmatpush1.xpose.msra.mxu0 0.0
    %279 = vmatprep.subr.mxu0 0.0
    %280 = vmatpush1.xpose.msra.mxu0 0.0
    %281 = vmatprep.subr.mxu0 0.0
    %282 = vmatpush1.xpose.msra.mxu0 0.0
    %283 = vmatprep.subr.mxu0 0.0
    %284 = vmatpush1.xpose.msra.mxu0 0.0
    %285 = vmatprep.subr.mxu0 0.0
    %286 = vmatpush1.xpose.msra.mxu0 0.0
    %287 = vmatprep.subr.mxu0 0.0
    %288 = vmatpush1.xpose.msra.mxu0 0.0
    %289 = vmatprep.subr.mxu0 0.0
    %290 = vmatpush1.xpose.msra.mxu0 0.0
    %291 = vmatprep.subr.mxu0 0.0
    %292 = vmatpush1.xpose.msra.mxu0 0.0
    %293 = vmatprep.subr.mxu0 0.0
    %294 = vmatpush1.xpose.msra.mxu0 0.0
    %295 = vmatprep.subr.mxu0 0.0
    %296 = vmatpush1.xpose.msra.mxu0 0.0
    %297 = vmatprep.subr.mxu0 0.0
    %298 = vmatpush1.xpose.msra.mxu0 0.0
    %299 = vmatprep.subr.mxu0 0.0
    %300 = vmatpush1.xpose.msra.mxu0 0.0
    %301 = vmatprep.subr.mxu0 0.0
    %302 = vmatpush1.xpose.msra.mxu0 0.0
    %303 = vmatprep.subr.mxu0 0.0
    %304 = vmatpush1.xpose.msra.mxu0 0.0
    %305 = vmatprep.subr.mxu0 0.0
    %306 = vmatpush1.xpose.msra.mxu0 0.0
    %307 = vmatprep.subr.mxu0 0.0
    %308 = vmatpush1.xpose.msra.mxu0 0.0
    %309 = vmatprep.subr.mxu0 0.0
    %310 = vmatpush1.xpose.msra.mxu0 0.0
    %311 = vmatprep.subr.mxu0 0.0
    %312 = vmatpush1.xpose.msra.mxu0 0.0
    %313 = vmatprep.subr.mxu0 0.0
    %314 = vmatpush1.xpose.msra.mxu0 0.0
    %315 = vmatprep.subr.mxu0 0.0
    %316 = vmatpush1.xpose.msra.mxu0 0.0
    %317 = vmatprep.subr.mxu0 0.0
    %318 = vmatpush1.xpose.msra.mxu0 0.0
    %319 = vmatprep.subr.mxu0 0.0
    %320 = vmatpush1.xpose.msra.mxu0 0.0
    %321 = vmatprep.subr.mxu0 0.0
    %322 = vmatpush1.xpose.msra.mxu0 0.0
    %323 = vmatprep.subr.mxu0 0.0
    %324 = vmatpush1.xpose.msra.mxu0 0.0
    %325 = vmatprep.subr.mxu0 0.0
    %326 = vmatpush1.xpose.msra.mxu0 0.0
    %327 = vmatprep.subr.mxu0 0.0
    %328 = vmatpush1.xpose.msra.mxu0 0.0
    %329 = vmatprep.subr.mxu0 0.0
    %330 = vmatpush1.xpose.msra.mxu0 0.0
    %331 = vmatprep.subr.mxu0 0.0
    %332 = vmatpush1.xpose.msra.mxu0 0.0
    %333 = vmatprep.mubr.f32.mxu0 0.0
    %334 = vmatmul.mubr.f32.gmra.mrb[0].mxu0 %v264
    %v335 = vpop.f32.mrb[0].mxu0
    %v336 = vadd.f32 0.0, %v335
    %v337 = vpop.f32.mrb[0].mxu0
    %338 = vdwg.mxu0
    %v340 = vsel %vm110, %v105, 0
    %v343 = vsel %vm110, %v89, 0
    %345 = vmatprep.subr.mxu0 0.0
    %346 = vmatpush1.xpose.msra.mxu0 %v343
    %347 = vmatprep.subr.mxu0 0.0
    %348 = vmatpush1.xpose.msra.mxu0 0.0
    %349 = vmatprep.subr.mxu0 0.0
    %350 = vmatpush1.xpose.msra.mxu0 0.0
    %351 = vmatprep.subr.mxu0 0.0
    %352 = vmatpush1.xpose.msra.mxu0 0.0
    %353 = vmatprep.subr.mxu0 0.0
    %354 = vmatpush1.xpose.msra.mxu0 0.0
    %355 = vmatprep.subr.mxu0 0.0
    %356 = vmatpush1.xpose.msra.mxu0 0.0
    %357 = vmatprep.subr.mxu0 0.0
    %358 = vmatpush1.xpose.msra.mxu0 0.0
    %359 = vmatprep.subr.mxu0 0.0
    %360 = vmatpush1.xpose.msra.mxu0 0.0
    %361 = vmatprep.subr.mxu0 0.0
    %362 = vmatpush1.xpose.msra.mxu0 0.0
    %363 = vmatprep.subr.mxu0 0.0
    %364 = vmatpush1.xpose.msra.mxu0 0.0
    %365 = vmatprep.subr.mxu0 0.0
    %366 = vmatpush1.xpose.msra.mxu0 0.0
    %367 = vmatprep.subr.mxu0 0.0
    %368 = vmatpush1.xpose.msra.mxu0 0.0
    %369 = vmatprep.subr.mxu0 0.0
    %370 = vmatpush1.xpose.msra.mxu0 0.0
    %371 = vmatprep.subr.mxu0 0.0
    %372 = vmatpush1.xpose.msra.mxu0 0.0
    %373 = vmatprep.subr.mxu0 0.0
    %374 = vmatpush1.xpose.msra.mxu0 0.0
    %375 = vmatprep.subr.mxu0 0.0
    %376 = vmatpush1.xpose.msra.mxu0 0.0
    %377 = vmatprep.subr.mxu0 0.0
    %378 = vmatpush1.xpose.msra.mxu0 0.0
    %379 = vmatprep.subr.mxu0 0.0
    %380 = vmatpush1.xpose.msra.mxu0 0.0
    %381 = vmatprep.subr.mxu0 0.0
    %382 = vmatpush1.xpose.msra.mxu0 0.0
    %383 = vmatprep.subr.mxu0 0.0
    %384 = vmatpush1.xpose.msra.mxu0 0.0
    %385 = vmatprep.subr.mxu0 0.0
    %386 = vmatpush1.xpose.msra.mxu0 0.0
    %387 = vmatprep.subr.mxu0 0.0
    %388 = vmatpush1.xpose.msra.mxu0 0.0
    %389 = vmatprep.subr.mxu0 0.0
    %390 = vmatpush1.xpose.msra.mxu0 0.0
    %391 = vmatprep.subr.mxu0 0.0
    %392 = vmatpush1.xpose.msra.mxu0 0.0
    %393 = vmatprep.subr.mxu0 0.0
    %394 = vmatpush1.xpose.msra.mxu0 0.0
    %395 = vmatprep.subr.mxu0 0.0
    %396 = vmatpush1.xpose.msra.mxu0 0.0
    %397 = vmatprep.subr.mxu0 0.0
    %398 = vmatpush1.xpose.msra.mxu0 0.0
    %399 = vmatprep.subr.mxu0 0.0
    %400 = vmatpush1.xpose.msra.mxu0 0.0
    %401 = vmatprep.subr.mxu0 0.0
    %402 = vmatpush1.xpose.msra.mxu0 0.0
    %403 = vmatprep.subr.mxu0 0.0
    %404 = vmatpush1.xpose.msra.mxu0 0.0
    %405 = vmatprep.subr.mxu0 0.0
    %406 = vmatpush1.xpose.msra.mxu0 0.0
    %407 = vmatprep.subr.mxu0 0.0
    %408 = vmatpush1.xpose.msra.mxu0 0.0
    %409 = vmatprep.mubr.f32.mxu0 0.0
    %410 = vmatmul.mubr.f32.gmra.mrb[0].mxu0 %v340
    %v411 = vpop.f32.mrb[0].mxu0
    %v412 = vadd.f32 0.0, %v411
    %v413 = vpop.f32.mrb[0].mxu0
    %414 = vdwg.mxu0
    %v416 = vsel %vm110, %v106, 0
    %v419 = vsel %vm110, %v90, 0
    %421 = vmatprep.subr.mxu0 0.0
    %422 = vmatpush1.xpose.msra.mxu0 %v419
    %423 = vmatprep.subr.mxu0 0.0
    %424 = vmatpush1.xpose.msra.mxu0 0.0
    %425 = vmatprep.subr.mxu0 0.0
    %426 = vmatpush1.xpose.msra.mxu0 0.0
    %427 = vmatprep.subr.mxu0 0.0
    %428 = vmatpush1.xpose.msra.mxu0 0.0
    %429 = vmatprep.subr.mxu0 0.0
    %430 = vmatpush1.xpose.msra.mxu0 0.0
    %431 = vmatprep.subr.mxu0 0.0
    %432 = vmatpush1.xpose.msra.mxu0 0.0
    %433 = vmatprep.subr.mxu0 0.0
    %434 = vmatpush1.xpose.msra.mxu0 0.0
    %435 = vmatprep.subr.mxu0 0.0
    %436 = vmatpush1.xpose.msra.mxu0 0.0
    %437 = vmatprep.subr.mxu0 0.0
    %438 = vmatpush1.xpose.msra.mxu0 0.0
    %439 = vmatprep.subr.mxu0 0.0
    %440 = vmatpush1.xpose.msra.mxu0 0.0
    %441 = vmatprep.subr.mxu0 0.0
    %442 = vmatpush1.xpose.msra.mxu0 0.0
    %443 = vmatprep.subr.mxu0 0.0
    %444 = vmatpush1.xpose.msra.mxu0 0.0
    %445 = vmatprep.subr.mxu0 0.0
    %446 = vmatpush1.xpose.msra.mxu0 0.0
    %447 = vmatprep.subr.mxu0 0.0
    %448 = vmatpush1.xpose.msra.mxu0 0.0
    %449 = vmatprep.subr.mxu0 0.0
    %450 = vmatpush1.xpose.msra.mxu0 0.0
    %451 = vmatprep.subr.mxu0 0.0
    %452 = vmatpush1.xpose.msra.mxu0 0.0
    %453 = vmatprep.subr.mxu0 0.0
    %454 = vmatpush1.xpose.msra.mxu0 0.0
    %455 = vmatprep.subr.mxu0 0.0
    %456 = vmatpush1.xpose.msra.mxu0 0.0
    %457 = vmatprep.subr.mxu0 0.0
    %458 = vmatpush1.xpose.msra.mxu0 0.0
    %459 = vmatprep.subr.mxu0 0.0
    %460 = vmatpush1.xpose.msra.mxu0 0.0
    %461 = vmatprep.subr.mxu0 0.0
    %462 = vmatpush1.xpose.msra.mxu0 0.0
    %463 = vmatprep.subr.mxu0 0.0
    %464 = vmatpush1.xpose.msra.mxu0 0.0
    %465 = vmatprep.subr.mxu0 0.0
    %466 = vmatpush1.xpose.msra.mxu0 0.0
    %467 = vmatprep.subr.mxu0 0.0
    %468 = vmatpush1.xpose.msra.mxu0 0.0
    %469 = vmatprep.subr.mxu0 0.0
    %470 = vmatpush1.xpose.msra.mxu0 0.0
    %471 = vmatprep.subr.mxu0 0.0
    %472 = vmatpush1.xpose.msra.mxu0 0.0
    %473 = vmatprep.subr.mxu0 0.0
    %474 = vmatpush1.xpose.msra.mxu0 0.0
    %475 = vmatprep.subr.mxu0 0.0
    %476 = vmatpush1.xpose.msra.mxu0 0.0
    %477 = vmatprep.subr.mxu0 0.0
    %478 = vmatpush1.xpose.msra.mxu0 0.0
    %479 = vmatprep.subr.mxu0 0.0
    %480 = vmatpush1.xpose.msra.mxu0 0.0
    %481 = vmatprep.subr.mxu0 0.0
    %482 = vmatpush1.xpose.msra.mxu0 0.0
    %483 = vmatprep.subr.mxu0 0.0
    %484 = vmatpush1.xpose.msra.mxu0 0.0
    %485 = vmatprep.mubr.f32.mxu0 0.0
    %486 = vmatmul.mubr.f32.gmra.mrb[0].mxu0 %v416
    %v487 = vpop.f32.mrb[0].mxu0
    %v488 = vadd.f32 0.0, %v487
    %v489 = vpop.f32.mrb[0].mxu0
    %490 = vdwg.mxu0
    %v492 = vsel %vm110, %v107, 0
    %v495 = vsel %vm110, %v91, 0
    %497 = vmatprep.subr.mxu0 0.0
    %498 = vmatpush1.xpose.msra.mxu0 %v495
    %499 = vmatprep.subr.mxu0 0.0
    %500 = vmatpush1.xpose.msra.mxu0 0.0
    %501 = vmatprep.subr.mxu0 0.0
    %502 = vmatpush1.xpose.msra.mxu0 0.0
    %503 = vmatprep.subr.mxu0 0.0
    %504 = vmatpush1.xpose.msra.mxu0 0.0
    %505 = vmatprep.subr.mxu0 0.0
    %506 = vmatpush1.xpose.msra.mxu0 0.0
    %507 = vmatprep.subr.mxu0 0.0
    %508 = vmatpush1.xpose.msra.mxu0 0.0
    %509 = vmatprep.subr.mxu0 0.0
    %510 = vmatpush1.xpose.msra.mxu0 0.0
    %511 = vmatprep.subr.mxu0 0.0
    %512 = vmatpush1.xpose.msra.mxu0 0.0
    %513 = vmatprep.subr.mxu0 0.0
    %514 = vmatpush1.xpose.msra.mxu0 0.0
    %515 = vmatprep.subr.mxu0 0.0
    %516 = vmatpush1.xpose.msra.mxu0 0.0
    %517 = vmatprep.subr.mxu0 0.0
    %518 = vmatpush1.xpose.msra.mxu0 0.0
    %519 = vmatprep.subr.mxu0 0.0
    %520 = vmatpush1.xpose.msra.mxu0 0.0
    %521 = vmatprep.subr.mxu0 0.0
    %522 = vmatpush1.xpose.msra.mxu0 0.0
    %523 = vmatprep.subr.mxu0 0.0
    %524 = vmatpush1.xpose.msra.mxu0 0.0
    %525 = vmatprep.subr.mxu0 0.0
    %526 = vmatpush1.xpose.msra.mxu0 0.0
    %527 = vmatprep.subr.mxu0 0.0
    %528 = vmatpush1.xpose.msra.mxu0 0.0
    %529 = vmatprep.subr.mxu0 0.0
    %530 = vmatpush1.xpose.msra.mxu0 0.0
    %531 = vmatprep.subr.mxu0 0.0
    %532 = vmatpush1.xpose.msra.mxu0 0.0
    %533 = vmatprep.subr.mxu0 0.0
    %534 = vmatpush1.xpose.msra.mxu0 0.0
    %535 = vmatprep.subr.mxu0 0.0
    %536 = vmatpush1.xpose.msra.mxu0 0.0
    %537 = vmatprep.subr.mxu0 0.0
    %538 = vmatpush1.xpose.msra.mxu0 0.0
    %539 = vmatprep.subr.mxu0 0.0
    %540 = vmatpush1.xpose.msra.mxu0 0.0
    %541 = vmatprep.subr.mxu0 0.0
    %542 = vmatpush1.xpose.msra.mxu0 0.0
    %543 = vmatprep.subr.mxu0 0.0
    %544 = vmatpush1.xpose.msra.mxu0 0.0
    %545 = vmatprep.subr.mxu0 0.0
    %546 = vmatpush1.xpose.msra.mxu0 0.0
    %547 = vmatprep.subr.mxu0 0.0
    %548 = vmatpush1.xpose.msra.mxu0 0.0
    %549 = vmatprep.subr.mxu0 0.0
    %550 = vmatpush1.xpose.msra.mxu0 0.0
    %551 = vmatprep.subr.mxu0 0.0
    %552 = vmatpush1.xpose.msra.mxu0 0.0
    %553 = vmatprep.subr.mxu0 0.0
    %554 = vmatpush1.xpose.msra.mxu0 0.0
    %555 = vmatprep.subr.mxu0 0.0
    %556 = vmatpush1.xpose.msra.mxu0 0.0
    %557 = vmatprep.subr.mxu0 0.0
    %558 = vmatpush1.xpose.msra.mxu0 0.0
    %559 = vmatprep.subr.mxu0 0.0
    %560 = vmatpush1.xpose.msra.mxu0 0.0
    %561 = vmatprep.mubr.f32.mxu0 0.0
    %562 = vmatmul.mubr.f32.gmra.mrb[0].mxu0 %v492
    %v563 = vpop.f32.mrb[0].mxu0
    %v564 = vadd.f32 0.0, %v563
    %v565 = vpop.f32.mrb[0].mxu0
    %566 = vdwg.mxu0
    %v568 = vsel %vm110, %v108, 0
    %v571 = vsel %vm110, %v92, 0
    %573 = vmatprep.subr.mxu0 0.0
    %574 = vmatpush1.xpose.msra.mxu0 %v571
    %575 = vmatprep.subr.mxu0 0.0
    %576 = vmatpush1.xpose.msra.mxu0 0.0
    %577 = vmatprep.subr.mxu0 0.0
    %578 = vmatpush1.xpose.msra.mxu0 0.0
    %579 = vmatprep.subr.mxu0 0.0
    %580 = vmatpush1.xpose.msra.mxu0 0.0
    %581 = vmatprep.subr.mxu0 0.0
    %582 = vmatpush1.xpose.msra.mxu0 0.0
    %583 = vmatprep.subr.mxu0 0.0
    %584 = vmatpush1.xpose.msra.mxu0 0.0
    %585 = vmatprep.subr.mxu0 0.0
    %586 = vmatpush1.xpose.msra.mxu0 0.0
    %587 = vmatprep.subr.mxu0 0.0
    %588 = vmatpush1.xpose.msra.mxu0 0.0
    %589 = vmatprep.subr.mxu0 0.0
    %590 = vmatpush1.xpose.msra.mxu0 0.0
    %591 = vmatprep.subr.mxu0 0.0
    %592 = vmatpush1.xpose.msra.mxu0 0.0
    %593 = vmatprep.subr.mxu0 0.0
    %594 = vmatpush1.xpose.msra.mxu0 0.0
    %595 = vmatprep.subr.mxu0 0.0
    %596 = vmatpush1.xpose.msra.mxu0 0.0
    %597 = vmatprep.subr.mxu0 0.0
    %598 = vmatpush1.xpose.msra.mxu0 0.0
    %599 = vmatprep.subr.mxu0 0.0
    %600 = vmatpush1.xpose.msra.mxu0 0.0
    %601 = vmatprep.subr.mxu0 0.0
    %602 = vmatpush1.xpose.msra.mxu0 0.0
    %603 = vmatprep.subr.mxu0 0.0
    %604 = vmatpush1.xpose.msra.mxu0 0.0
    %605 = vmatprep.subr.mxu0 0.0
    %606 = vmatpush1.xpose.msra.mxu0 0.0
    %607 = vmatprep.subr.mxu0 0.0
    %608 = vmatpush1.xpose.msra.mxu0 0.0
    %609 = vmatprep.subr.mxu0 0.0
    %610 = vmatpush1.xpose.msra.mxu0 0.0
    %611 = vmatprep.subr.mxu0 0.0
    %612 = vmatpush1.xpose.msra.mxu0 0.0
    %613 = vmatprep.subr.mxu0 0.0
    %614 = vmatpush1.xpose.msra.mxu0 0.0
    %615 = vmatprep.subr.mxu0 0.0
    %616 = vmatpush1.xpose.msra.mxu0 0.0
    %617 = vmatprep.subr.mxu0 0.0
    %618 = vmatpush1.xpose.msra.mxu0 0.0
    %619 = vmatprep.subr.mxu0 0.0
    %620 = vmatpush1.xpose.msra.mxu0 0.0
    %621 = vmatprep.subr.mxu0 0.0
    %622 = vmatpush1.xpose.msra.mxu0 0.0
    %623 = vmatprep.subr.mxu0 0.0
    %624 = vmatpush1.xpose.msra.mxu0 0.0
    %625 = vmatprep.subr.mxu0 0.0
    %626 = vmatpush1.xpose.msra.mxu0 0.0
    %627 = vmatprep.subr.mxu0 0.0
    %628 = vmatpush1.xpose.msra.mxu0 0.0
    %629 = vmatprep.subr.mxu0 0.0
    %630 = vmatpush1.xpose.msra.mxu0 0.0
    %631 = vmatprep.subr.mxu0 0.0
    %632 = vmatpush1.xpose.msra.mxu0 0.0
    %633 = vmatprep.subr.mxu0 0.0
    %634 = vmatpush1.xpose.msra.mxu0 0.0
    %635 = vmatprep.subr.mxu0 0.0
    %636 = vmatpush1.xpose.msra.mxu0 0.0
    %637 = vmatprep.mubr.f32.mxu0 0.0
    %638 = vmatmul.mubr.f32.gmra.mrb[0].mxu0 %v568
    %v639 = vpop.f32.mrb[0].mxu0
    %v640 = vadd.f32 0.0, %v639
    %v641 = vpop.f32.mrb[0].mxu0
    %642 = vdwg.mxu0
    %v644 = vsel %vm110, %v109, 0
    %v647 = vsel %vm110, %v93, 0
    %649 = vmatprep.subr.mxu0 0.0
    %650 = vmatpush1.xpose.msra.mxu0 %v647
    %651 = vmatprep.subr.mxu0 0.0
    %652 = vmatpush1.xpose.msra.mxu0 0.0
    %653 = vmatprep.subr.mxu0 0.0
    %654 = vmatpush1.xpose.msra.mxu0 0.0
    %655 = vmatprep.subr.mxu0 0.0
    %656 = vmatpush1.xpose.msra.mxu0 0.0
    %657 = vmatprep.subr.mxu0 0.0
    %658 = vmatpush1.xpose.msra.mxu0 0.0
    %659 = vmatprep.subr.mxu0 0.0
    %660 = vmatpush1.xpose.msra.mxu0 0.0
    %661 = vmatprep.subr.mxu0 0.0
    %662 = vmatpush1.xpose.msra.mxu0 0.0
    %663 = vmatprep.subr.mxu0 0.0
    %664 = vmatpush1.xpose.msra.mxu0 0.0
    %665 = vmatprep.subr.mxu0 0.0
    %666 = vmatpush1.xpose.msra.mxu0 0.0
    %667 = vmatprep.subr.mxu0 0.0
    %668 = vmatpush1.xpose.msra.mxu0 0.0
    %669 = vmatprep.subr.mxu0 0.0
    %670 = vmatpush1.xpose.msra.mxu0 0.0
    %671 = vmatprep.subr.mxu0 0.0
    %672 = vmatpush1.xpose.msra.mxu0 0.0
    %673 = vmatprep.subr.mxu0 0.0
    %674 = vmatpush1.xpose.msra.mxu0 0.0
    %675 = vmatprep.subr.mxu0 0.0
    %676 = vmatpush1.xpose.msra.mxu0 0.0
    %677 = vmatprep.subr.mxu0 0.0
    %678 = vmatpush1.xpose.msra.mxu0 0.0
    %679 = vmatprep.subr.mxu0 0.0
    %680 = vmatpush1.xpose.msra.mxu0 0.0
    %681 = vmatprep.subr.mxu0 0.0
    %682 = vmatpush1.xpose.msra.mxu0 0.0
    %683 = vmatprep.subr.mxu0 0.0
    %684 = vmatpush1.xpose.msra.mxu0 0.0
    %685 = vmatprep.subr.mxu0 0.0
    %686 = vmatpush1.xpose.msra.mxu0 0.0
    %687 = vmatprep.subr.mxu0 0.0
    %688 = vmatpush1.xpose.msra.mxu0 0.0
    %689 = vmatprep.subr.mxu0 0.0
    %690 = vmatpush1.xpose.msra.mxu0 0.0
    %691 = vmatprep.subr.mxu0 0.0
    %692 = vmatpush1.xpose.msra.mxu0 0.0
    %693 = vmatprep.subr.mxu0 0.0
    %694 = vmatpush1.xpose.msra.mxu0 0.0
    %695 = vmatprep.subr.mxu0 0.0
    %696 = vmatpush1.xpose.msra.mxu0 0.0
    %697 = vmatprep.subr.mxu0 0.0
    %698 = vmatpush1.xpose.msra.mxu0 0.0
    %699 = vmatprep.subr.mxu0 0.0
    %700 = vmatpush1.xpose.msra.mxu0 0.0
    %701 = vmatprep.subr.mxu0 0.0
    %702 = vmatpush1.xpose.msra.mxu0 0.0
    %703 = vmatprep.subr.mxu0 0.0
    %704 = vmatpush1.xpose.msra.mxu0 0.0
    %705 = vmatprep.subr.mxu0 0.0
    %706 = vmatpush1.xpose.msra.mxu0 0.0
    %707 = vmatprep.subr.mxu0 0.0
    %708 = vmatpush1.xpose.msra.mxu0 0.0
    %709 = vmatprep.subr.mxu0 0.0
    %710 = vmatpush1.xpose.msra.mxu0 0.0
    %711 = vmatprep.subr.mxu0 0.0
    %712 = vmatpush1.xpose.msra.mxu0 0.0
    %713 = vmatprep.mubr.f32.mxu0 0.0
    %714 = vmatmul.mubr.f32.gmra.mrb[0].mxu0 %v644
    %v715 = vpop.f32.mrb[0].mxu0
    %v716 = vadd.f32 0.0, %v715
    %v717 = vpop.f32.mrb[0].mxu0
    %718 = vdwg.mxu0
    %v719 = vld [vmem:[#allocation8] sm:$0x3]
    %v720 = vld [vmem:[#allocation8 + $0x2] sm:$0x3]
    %v721 = vld [vmem:[#allocation8 + $0x4] sm:$0x3]
    %v722 = vld [vmem:[#allocation8 + $0x6] sm:$0x3]
    %v723 = vld [vmem:[#allocation8 + $0x8] sm:$0x3]
    %v724 = vld [vmem:[#allocation8 + $0xa] sm:$0x3]
    %v725 = vld [vmem:[#allocation8 + $0xc] sm:$0x3]
    %v726 = vld [vmem:[#allocation8 + $0xe] sm:$0x3]
    %vm727 = vnez %v719
    %vm728 = vnez %v720
    %vm729 = vnez %v721
    %vm730 = vnez %v722
    %vm731 = vnez %v723
    %vm732 = vnez %v724
    %vm733 = vnez %v725
    %vm734 = vnez %v726
    %v735 = vsel %vm727, 16843009, 0
    %v736 = vsel %vm728, 16843009, 0
    %v737 = vsel %vm729, 16843009, 0
    %v738 = vsel %vm730, 16843009, 0
    %v739 = vsel %vm731, 16843009, 0
    %v740 = vsel %vm732, 16843009, 0
    %v741 = vsel %vm733, 16843009, 0
    %v742 = vsel %vm734, 16843009, 0
    %v743 = vunpack.c.0.s8 %v735
    %v744 = vunpack.c.0.s8 %v736
    %v745 = vunpack.c.0.s8 %v737
    %v746 = vunpack.c.0.s8 %v738
    %v747 = vunpack.c.0.s8 %v739
    %v748 = vunpack.c.0.s8 %v740
    %v749 = vunpack.c.0.s8 %v741
    %v750 = vunpack.c.0.s8 %v742
    %vm751 = vcmp.ne.s32.totalorder %v743, 0
    %vm752 = vcmp.ne.s32.totalorder %v744, 0
    %vm753 = vcmp.ne.s32.totalorder %v745, 0
    %vm754 = vcmp.ne.s32.totalorder %v746, 0
    %vm755 = vcmp.ne.s32.totalorder %v747, 0
    %vm756 = vcmp.ne.s32.totalorder %v748, 0
    %vm757 = vcmp.ne.s32.totalorder %v749, 0
    %vm758 = vcmp.ne.s32.totalorder %v750, 0
    %v759 = vsel %vm751, -1e+30, %v184
    %v760 = vsel %vm752, -1e+30, %v260
    %v761 = vsel %vm753, -1e+30, %v336
    %v762 = vsel %vm754, -1e+30, %v412
    %v763 = vsel %vm755, -1e+30, %v488
    %v764 = vsel %vm756, -1e+30, %v564
    %v765 = vsel %vm757, -1e+30, %v640
    %v766 = vsel %vm758, -1e+30, %v716
    %vm767 = vcmask 64512
    %v768 = vsel %vm767, %v759, -inf
    %769 = vmax.xlane.f32.xlu0 %v768
    %v770 = vpop.xlane.xlu0 %769
    %v771 = vsel %vm767, %v760, -inf
    %772 = vmax.xlane.f32.xlu0 %v771
    %v773 = vpop.xlane.xlu0 %772
    %v774 = vsel %vm767, %v761, -inf
    %775 = vmax.xlane.f32.xlu0 %v774
    %v776 = vpop.xlane.xlu0 %775
    %v777 = vsel %vm767, %v762, -inf
    %778 = vmax.xlane.f32.xlu0 %v777
    %v779 = vpop.xlane.xlu0 %778
    %v780 = vsel %vm767, %v763, -inf
    %781 = vmax.xlane.f32.xlu0 %v780
    %v782 = vpop.xlane.xlu0 %781
    %v783 = vsel %vm767, %v764, -inf
    %784 = vmax.xlane.f32.xlu0 %v783
    %v785 = vpop.xlane.xlu0 %784
    %v786 = vsel %vm767, %v765, -inf
    %787 = vmax.xlane.f32.xlu0 %v786
    %v788 = vpop.xlane.xlu0 %787
    %v789 = vsel %vm767, %v766, -inf
    %790 = vmax.xlane.f32.xlu0 %v789
    %v791 = vpop.xlane.xlu0 %790
    %v792 = vsub.f32 %v759, %v770
    %v793 = vsub.f32 %v760, %v773
    %v794 = vsub.f32 %v761, %v776
    %v795 = vsub.f32 %v762, %v779
    %v796 = vsub.f32 %v763, %v782
    %v797 = vsub.f32 %v764, %v785
    %v798 = vsub.f32 %v765, %v788
    %v799 = vsub.f32 %v766, %v791
    %v800 = vmul.f32 %v792, 1.442695
    %v801 = vpow.pop %v800
    %v802 = vmul.f32 %v793, 1.442695
    %v803 = vpow.pop %v802
    %v804 = vmul.f32 %v794, 1.442695
    %v805 = vpow.pop %v804
    %v806 = vmul.f32 %v795, 1.442695
    %v807 = vpow.pop %v806
    %v808 = vmul.f32 %v796, 1.442695
    %v809 = vpow.pop %v808
    %v810 = vmul.f32 %v797, 1.442695
    %v811 = vpow.pop %v810
    %v812 = vmul.f32 %v798, 1.442695
    %v813 = vpow.pop %v812
    %v814 = vmul.f32 %v799, 1.442695
    %v815 = vpow.pop %v814
    %v816 = vsel %vm767, %v801, 0.0
    %817 = vadd.xlane.f32.xlu0 %v816
    %v818 = vpop.xlane.xlu0 %817
    %v819 = vsel %vm767, %v803, 0.0
    %820 = vadd.xlane.f32.xlu0 %v819
    %v821 = vpop.xlane.xlu0 %820
    %v822 = vsel %vm767, %v805, 0.0
    %823 = vadd.xlane.f32.xlu0 %v822
    %v824 = vpop.xlane.xlu0 %823
    %v825 = vsel %vm767, %v807, 0.0
    %826 = vadd.xlane.f32.xlu0 %v825
    %v827 = vpop.xlane.xlu0 %826
    %v828 = vsel %vm767, %v809, 0.0
    %829 = vadd.xlane.f32.xlu0 %v828
    %v830 = vpop.xlane.xlu0 %829
    %v831 = vsel %vm767, %v811, 0.0
    %832 = vadd.xlane.f32.xlu0 %v831
    %v833 = vpop.xlane.xlu0 %832
    %v834 = vsel %vm767, %v813, 0.0
    %835 = vadd.xlane.f32.xlu0 %v834
    %v836 = vpop.xlane.xlu0 %835
    %v837 = vsel %vm767, %v815, 0.0
    %838 = vadd.xlane.f32.xlu0 %v837
    %v839 = vpop.xlane.xlu0 %838
    %v840 = vrcp.pop %v818
    %v841 = vrcp.pop %v821
    %v842 = vrcp.pop %v824
    %v843 = vrcp.pop %v827
    %v844 = vrcp.pop %v830
    %v845 = vrcp.pop %v833
    %v846 = vrcp.pop %v836
    %v847 = vrcp.pop %v839
    %v848 = vmul.f32 %v801, %v840
    %v849 = vmul.f32 %v803, %v841
    %v850 = vmul.f32 %v805, %v842
    %v851 = vmul.f32 %v807, %v843
    %v852 = vmul.f32 %v809, %v844
    %v853 = vmul.f32 %v811, %v845
    %v854 = vmul.f32 %v813, %v846
    %v855 = vmul.f32 %v815, %v847
    %856 = vst.msk [vmem:[#allocation11] sm:$0xff] %vm767, %v848
    %857 = vst.msk [vmem:[#allocation11 + $0x8] sm:$0xff] %vm767, %v849
    %858 = vst.msk [vmem:[#allocation11 + $0x10] sm:$0xff] %vm767, %v850
    %859 = vst.msk [vmem:[#allocation11 + $0x18] sm:$0xff] %vm767, %v851
    %860 = vst.msk [vmem:[#allocation11 + $0x20] sm:$0xff] %vm767, %v852
    %861 = vst.msk [vmem:[#allocation11 + $0x28] sm:$0xff] %vm767, %v853
    %862 = vst.msk [vmem:[#allocation11 + $0x30] sm:$0xff] %vm767, %v854
    %863 = vst.msk [vmem:[#allocation11 + $0x38] sm:$0xff] %vm767, %v855
    %v865 = vsel %vm767, %v848, 0
    %867 = vmatprep.subr.mxu0 0.0
    %868 = vmatpush1.msra.mxu0 %v94
    %869 = vmatprep.subr.mxu0 0.0
    %870 = vmatpush1.msra.mxu0 0.0
    %871 = vmatprep.subr.mxu0 0.0
    %872 = vmatpush1.msra.mxu0 0.0
    %873 = vmatprep.subr.mxu0 0.0
    %874 = vmatpush1.msra.mxu0 0.0
    %875 = vmatprep.subr.mxu0 0.0
    %876 = vmatpush1.msra.mxu0 0.0
    %877 = vmatprep.subr.mxu0 0.0
    %878 = vmatpush1.msra.mxu0 0.0
    %879 = vmatprep.subr.mxu0 0.0
    %880 = vmatpush1.msra.mxu0 0.0
    %881 = vmatprep.subr.mxu0 0.0
    %882 = vmatpush1.msra.mxu0 0.0
    %883 = vmatprep.subr.mxu0 0.0
    %884 = vmatpush1.msra.mxu0 0.0
    %885 = vmatprep.subr.mxu0 0.0
    %886 = vmatpush1.msra.mxu0 0.0
    %887 = vmatprep.subr.mxu0 0.0
    %888 = vmatpush1.msra.mxu0 0.0
    %889 = vmatprep.subr.mxu0 0.0
    %890 = vmatpush1.msra.mxu0 0.0
    %891 = vmatprep.subr.mxu0 0.0
    %892 = vmatpush1.msra.mxu0 0.0
    %893 = vmatprep.subr.mxu0 0.0
    %894 = vmatpush1.msra.mxu0 0.0
    %895 = vmatprep.subr.mxu0 0.0
    %896 = vmatpush1.msra.mxu0 0.0
    %897 = vmatprep.subr.mxu0 0.0
    %898 = vmatpush1.msra.mxu0 0.0
    %899 = vmatprep.subr.mxu0 0.0
    %900 = vmatpush1.msra.mxu0 0.0
    %901 = vmatprep.subr.mxu0 0.0
    %902 = vmatpush1.msra.mxu0 0.0
    %903 = vmatprep.subr.mxu0 0.0
    %904 = vmatpush1.msra.mxu0 0.0
    %905 = vmatprep.subr.mxu0 0.0
    %906 = vmatpush1.msra.mxu0 0.0
    %907 = vmatprep.subr.mxu0 0.0
    %908 = vmatpush1.msra.mxu0 0.0
    %909 = vmatprep.subr.mxu0 0.0
    %910 = vmatpush1.msra.mxu0 0.0
    %911 = vmatprep.subr.mxu0 0.0
    %912 = vmatpush1.msra.mxu0 0.0
    %913 = vmatprep.subr.mxu0 0.0
    %914 = vmatpush1.msra.mxu0 0.0
    %915 = vmatprep.subr.mxu0 0.0
    %916 = vmatpush1.msra.mxu0 0.0
    %917 = vmatprep.subr.mxu0 0.0
    %918 = vmatpush1.msra.mxu0 0.0
    %919 = vmatprep.subr.mxu0 0.0
    %920 = vmatpush1.msra.mxu0 0.0
    %921 = vmatprep.subr.mxu0 0.0
    %922 = vmatpush1.msra.mxu0 0.0
    %923 = vmatprep.subr.mxu0 0.0
    %924 = vmatpush1.msra.mxu0 0.0
    %925 = vmatprep.subr.mxu0 0.0
    %926 = vmatpush1.msra.mxu0 0.0
    %927 = vmatprep.subr.mxu0 0.0
    %928 = vmatpush1.msra.mxu0 0.0
    %929 = vmatprep.subr.mxu0 0.0
    %930 = vmatpush1.msra.mxu0 0.0
    %931 = vmatprep.mubr.f32.mxu0 0.0
    %932 = vmatmul.mubr.f32.gmra.mrb[0].mxu0 %v865
    %v933 = vpop.f32.mrb[0].mxu0
    %v934 = vadd.f32 0.0, %v933
    %v935 = vpop.f32.mrb[0].mxu0
    %936 = vdwg.mxu0
    %v938 = vsel %vm767, %v849, 0
    %940 = vmatprep.subr.mxu0 0.0
    %941 = vmatpush1.msra.mxu0 %v95
    %942 = vmatprep.subr.mxu0 0.0
    %943 = vmatpush1.msra.mxu0 0.0
    %944 = vmatprep.subr.mxu0 0.0
    %945 = vmatpush1.msra.mxu0 0.0
    %946 = vmatprep.subr.mxu0 0.0
    %947 = vmatpush1.msra.mxu0 0.0
    %948 = vmatprep.subr.mxu0 0.0
    %949 = vmatpush1.msra.mxu0 0.0
    %950 = vmatprep.subr.mxu0 0.0
    %951 = vmatpush1.msra.mxu0 0.0
    %952 = vmatprep.subr.mxu0 0.0
    %953 = vmatpush1.msra.mxu0 0.0
    %954 = vmatprep.subr.mxu0 0.0
    %955 = vmatpush1.msra.mxu0 0.0
    %956 = vmatprep.subr.mxu0 0.0
    %957 = vmatpush1.msra.mxu0 0.0
    %958 = vmatprep.subr.mxu0 0.0
    %959 = vmatpush1.msra.mxu0 0.0
    %960 = vmatprep.subr.mxu0 0.0
    %961 = vmatpush1.msra.mxu0 0.0
    %962 = vmatprep.subr.mxu0 0.0
    %963 = vmatpush1.msra.mxu0 0.0
    %964 = vmatprep.subr.mxu0 0.0
    %965 = vmatpush1.msra.mxu0 0.0
    %966 = vmatprep.subr.mxu0 0.0
    %967 = vmatpush1.msra.mxu0 0.0
    %968 = vmatprep.subr.mxu0 0.0
    %969 = vmatpush1.msra.mxu0 0.0
    %970 = vmatprep.subr.mxu0 0.0
    %971 = vmatpush1.msra.mxu0 0.0
    %972 = vmatprep.subr.mxu0 0.0
    %973 = vmatpush1.msra.mxu0 0.0
    %974 = vmatprep.subr.mxu0 0.0
    %975 = vmatpush1.msra.mxu0 0.0
    %976 = vmatprep.subr.mxu0 0.0
    %977 = vmatpush1.msra.mxu0 0.0
    %978 = vmatprep.subr.mxu0 0.0
    %979 = vmatpush1.msra.mxu0 0.0
    %980 = vmatprep.subr.mxu0 0.0
    %981 = vmatpush1.msra.mxu0 0.0
    %982 = vmatprep.subr.mxu0 0.0
    %983 = vmatpush1.msra.mxu0 0.0
    %984 = vmatprep.subr.mxu0 0.0
    %985 = vmatpush1.msra.mxu0 0.0
    %986 = vmatprep.subr.mxu0 0.0
    %987 = vmatpush1.msra.mxu0 0.0
    %988 = vmatprep.subr.mxu0 0.0
    %989 = vmatpush1.msra.mxu0 0.0
    %990 = vmatprep.subr.mxu0 0.0
    %991 = vmatpush1.msra.mxu0 0.0
    %992 = vmatprep.subr.mxu0 0.0
    %993 = vmatpush1.msra.mxu0 0.0
    %994 = vmatprep.subr.mxu0 0.0
    %995 = vmatpush1.msra.mxu0 0.0
    %996 = vmatprep.subr.mxu0 0.0
    %997 = vmatpush1.msra.mxu0 0.0
    %998 = vmatprep.subr.mxu0 0.0
    %999 = vmatpush1.msra.mxu0 0.0
    %1000 = vmatprep.subr.mxu0 0.0
    %1001 = vmatpush1.msra.mxu0 0.0
    %1002 = vmatprep.subr.mxu0 0.0
    %1003 = vmatpush1.msra.mxu0 0.0
    %1004 = vmatprep.mubr.f32.mxu0 0.0
    %1005 = vmatmul.mubr.f32.gmra.mrb[0].mxu0 %v938
    %v1006 = vpop.f32.mrb[0].mxu0
    %v1007 = vadd.f32 0.0, %v1006
    %v1008 = vpop.f32.mrb[0].mxu0
    %1009 = vdwg.mxu0
    %v1011 = vsel %vm767, %v850, 0
    %1013 = vmatprep.subr.mxu0 0.0
    %1014 = vmatpush1.msra.mxu0 %v96
    %1015 = vmatprep.subr.mxu0 0.0
    %1016 = vmatpush1.msra.mxu0 0.0
    %1017 = vmatprep.subr.mxu0 0.0
    %1018 = vmatpush1.msra.mxu0 0.0
    %1019 = vmatprep.subr.mxu0 0.0
    %1020 = vmatpush1.msra.mxu0 0.0
    %1021 = vmatprep.subr.mxu0 0.0
    %1022 = vmatpush1.msra.mxu0 0.0
    %1023 = vmatprep.subr.mxu0 0.0
    %1024 = vmatpush1.msra.mxu0 0.0
    %1025 = vmatprep.subr.mxu0 0.0
    %1026 = vmatpush1.msra.mxu0 0.0
    %1027 = vmatprep.subr.mxu0 0.0
    %1028 = vmatpush1.msra.mxu0 0.0
    %1029 = vmatprep.subr.mxu0 0.0
    %1030 = vmatpush1.msra.mxu0 0.0
    %1031 = vmatprep.subr.mxu0 0.0
    %1032 = vmatpush1.msra.mxu0 0.0
    %1033 = vmatprep.subr.mxu0 0.0
    %1034 = vmatpush1.msra.mxu0 0.0
    %1035 = vmatprep.subr.mxu0 0.0
    %1036 = vmatpush1.msra.mxu0 0.0
    %1037 = vmatprep.subr.mxu0 0.0
    %1038 = vmatpush1.msra.mxu0 0.0
    %1039 = vmatprep.subr.mxu0 0.0
    %1040 = vmatpush1.msra.mxu0 0.0
    %1041 = vmatprep.subr.mxu0 0.0
    %1042 = vmatpush1.msra.mxu0 0.0
    %1043 = vmatprep.subr.mxu0 0.0
    %1044 = vmatpush1.msra.mxu0 0.0
    %1045 = vmatprep.subr.mxu0 0.0
    %1046 = vmatpush1.msra.mxu0 0.0
    %1047 = vmatprep.subr.mxu0 0.0
    %1048 = vmatpush1.msra.mxu0 0.0
    %1049 = vmatprep.subr.mxu0 0.0
    %1050 = vmatpush1.msra.mxu0 0.0
    %1051 = vmatprep.subr.mxu0 0.0
    %1052 = vmatpush1.msra.mxu0 0.0
    %1053 = vmatprep.subr.mxu0 0.0
    %1054 = vmatpush1.msra.mxu0 0.0
    %1055 = vmatprep.subr.mxu0 0.0
    %1056 = vmatpush1.msra.mxu0 0.0
    %1057 = vmatprep.subr.mxu0 0.0
    %1058 = vmatpush1.msra.mxu0 0.0
    %1059 = vmatprep.subr.mxu0 0.0
    %1060 = vmatpush1.msra.mxu0 0.0
    %1061 = vmatprep.subr.mxu0 0.0
    %1062 = vmatpush1.msra.mxu0 0.0
    %1063 = vmatprep.subr.mxu0 0.0
    %1064 = vmatpush1.msra.mxu0 0.0
    %1065 = vmatprep.subr.mxu0 0.0
    %1066 = vmatpush1.msra.mxu0 0.0
    %1067 = vmatprep.subr.mxu0 0.0
    %1068 = vmatpush1.msra.mxu0 0.0
    %1069 = vmatprep.subr.mxu0 0.0
    %1070 = vmatpush1.msra.mxu0 0.0
    %1071 = vmatprep.subr.mxu0 0.0
    %1072 = vmatpush1.msra.mxu0 0.0
    %1073 = vmatprep.subr.mxu0 0.0
    %1074 = vmatpush1.msra.mxu0 0.0
    %1075 = vmatprep.subr.mxu0 0.0
    %1076 = vmatpush1.msra.mxu0 0.0
    %1077 = vmatprep.mubr.f32.mxu0 0.0
    %1078 = vmatmul.mubr.f32.gmra.mrb[0].mxu0 %v1011
    %v1079 = vpop.f32.mrb[0].mxu0
    %v1080 = vadd.f32 0.0, %v1079
    %v1081 = vpop.f32.mrb[0].mxu0
    %1082 = vdwg.mxu0
    %v1084 = vsel %vm767, %v851, 0
    %1086 = vmatprep.subr.mxu0 0.0
    %1087 = vmatpush1.msra.mxu0 %v97
    %1088 = vmatprep.subr.mxu0 0.0
    %1089 = vmatpush1.msra.mxu0 0.0
    %1090 = vmatprep.subr.mxu0 0.0
    %1091 = vmatpush1.msra.mxu0 0.0
    %1092 = vmatprep.subr.mxu0 0.0
    %1093 = vmatpush1.msra.mxu0 0.0
    %1094 = vmatprep.subr.mxu0 0.0
    %1095 = vmatpush1.msra.mxu0 0.0
    %1096 = vmatprep.subr.mxu0 0.0
    %1097 = vmatpush1.msra.mxu0 0.0
    %1098 = vmatprep.subr.mxu0 0.0
    %1099 = vmatpush1.msra.mxu0 0.0
    %1100 = vmatprep.subr.mxu0 0.0
    %1101 = vmatpush1.msra.mxu0 0.0
    %1102 = vmatprep.subr.mxu0 0.0
    %1103 = vmatpush1.msra.mxu0 0.0
    %1104 = vmatprep.subr.mxu0 0.0
    %1105 = vmatpush1.msra.mxu0 0.0
    %1106 = vmatprep.subr.mxu0 0.0
    %1107 = vmatpush1.msra.mxu0 0.0
    %1108 = vmatprep.subr.mxu0 0.0
    %1109 = vmatpush1.msra.mxu0 0.0
    %1110 = vmatprep.subr.mxu0 0.0
    %1111 = vmatpush1.msra.mxu0 0.0
    %1112 = vmatprep.subr.mxu0 0.0
    %1113 = vmatpush1.msra.mxu0 0.0
    %1114 = vmatprep.subr.mxu0 0.0
    %1115 = vmatpush1.msra.mxu0 0.0
    %1116 = vmatprep.subr.mxu0 0.0
    %1117 = vmatpush1.msra.mxu0 0.0
    %1118 = vmatprep.subr.mxu0 0.0
    %1119 = vmatpush1.msra.mxu0 0.0
    %1120 = vmatprep.subr.mxu0 0.0
    %1121 = vmatpush1.msra.mxu0 0.0
    %1122 = vmatprep.subr.mxu0 0.0
    %1123 = vmatpush1.msra.mxu0 0.0
    %1124 = vmatprep.subr.mxu0 0.0
    %1125 = vmatpush1.msra.mxu0 0.0
    %1126 = vmatprep.subr.mxu0 0.0
    %1127 = vmatpush1.msra.mxu0 0.0
    %1128 = vmatprep.subr.mxu0 0.0
    %1129 = vmatpush1.msra.mxu0 0.0
    %1130 = vmatprep.subr.mxu0 0.0
    %1131 = vmatpush1.msra.mxu0 0.0
    %1132 = vmatprep.subr.mxu0 0.0
    %1133 = vmatpush1.msra.mxu0 0.0
    %1134 = vmatprep.subr.mxu0 0.0
    %1135 = vmatpush1.msra.mxu0 0.0
    %1136 = vmatprep.subr.mxu0 0.0
    %1137 = vmatpush1.msra.mxu0 0.0
    %1138 = vmatprep.subr.mxu0 0.0
    %1139 = vmatpush1.msra.mxu0 0.0
    %1140 = vmatprep.subr.mxu0 0.0
    %1141 = vmatpush1.msra.mxu0 0.0
    %1142 = vmatprep.subr.mxu0 0.0
    %1143 = vmatpush1.msra.mxu0 0.0
    %1144 = vmatprep.subr.mxu0 0.0
    %1145 = vmatpush1.msra.mxu0 0.0
    %1146 = vmatprep.subr.mxu0 0.0
    %1147 = vmatpush1.msra.mxu0 0.0
    %1148 = vmatprep.subr.mxu0 0.0
    %1149 = vmatpush1.msra.mxu0 0.0
    %1150 = vmatprep.mubr.f32.mxu0 0.0
    %1151 = vmatmul.mubr.f32.gmra.mrb[0].mxu0 %v1084
    %v1152 = vpop.f32.mrb[0].mxu0
    %v1153 = vadd.f32 0.0, %v1152
    %v1154 = vpop.f32.mrb[0].mxu0
    %1155 = vdwg.mxu0
    %v1157 = vsel %vm767, %v852, 0
    %1159 = vmatprep.subr.mxu0 0.0
    %1160 = vmatpush1.msra.mxu0 %v98
    %1161 = vmatprep.subr.mxu0 0.0
    %1162 = vmatpush1.msra.mxu0 0.0
    %1163 = vmatprep.subr.mxu0 0.0
    %1164 = vmatpush1.msra.mxu0 0.0
    %1165 = vmatprep.subr.mxu0 0.0
    %1166 = vmatpush1.msra.mxu0 0.0
    %1167 = vmatprep.subr.mxu0 0.0
    %1168 = vmatpush1.msra.mxu0 0.0
    %1169 = vmatprep.subr.mxu0 0.0
    %1170 = vmatpush1.msra.mxu0 0.0
    %1171 = vmatprep.subr.mxu0 0.0
    %1172 = vmatpush1.msra.mxu0 0.0
    %1173 = vmatprep.subr.mxu0 0.0
    %1174 = vmatpush1.msra.mxu0 0.0
    %1175 = vmatprep.subr.mxu0 0.0
    %1176 = vmatpush1.msra.mxu0 0.0
    %1177 = vmatprep.subr.mxu0 0.0
    %1178 = vmatpush1.msra.mxu0 0.0
    %1179 = vmatprep.subr.mxu0 0.0
    %1180 = vmatpush1.msra.mxu0 0.0
    %1181 = vmatprep.subr.mxu0 0.0
    %1182 = vmatpush1.msra.mxu0 0.0
    %1183 = vmatprep.subr.mxu0 0.0
    %1184 = vmatpush1.msra.mxu0 0.0
    %1185 = vmatprep.subr.mxu0 0.0
    %1186 = vmatpush1.msra.mxu0 0.0
    %1187 = vmatprep.subr.mxu0 0.0
    %1188 = vmatpush1.msra.mxu0 0.0
    %1189 = vmatprep.subr.mxu0 0.0
    %1190 = vmatpush1.msra.mxu0 0.0
    %1191 = vmatprep.subr.mxu0 0.0
    %1192 = vmatpush1.msra.mxu0 0.0
    %1193 = vmatprep.subr.mxu0 0.0
    %1194 = vmatpush1.msra.mxu0 0.0
    %1195 = vmatprep.subr.mxu0 0.0
    %1196 = vmatpush1.msra.mxu0 0.0
    %1197 = vmatprep.subr.mxu0 0.0
    %1198 = vmatpush1.msra.mxu0 0.0
    %1199 = vmatprep.subr.mxu0 0.0
    %1200 = vmatpush1.msra.mxu0 0.0
    %1201 = vmatprep.subr.mxu0 0.0
    %1202 = vmatpush1.msra.mxu0 0.0
    %1203 = vmatprep.subr.mxu0 0.0
    %1204 = vmatpush1.msra.mxu0 0.0
    %1205 = vmatprep.subr.mxu0 0.0
    %1206 = vmatpush1.msra.mxu0 0.0
    %1207 = vmatprep.subr.mxu0 0.0
    %1208 = vmatpush1.msra.mxu0 0.0
    %1209 = vmatprep.subr.mxu0 0.0
    %1210 = vmatpush1.msra.mxu0 0.0
    %1211 = vmatprep.subr.mxu0 0.0
    %1212 = vmatpush1.msra.mxu0 0.0
    %1213 = vmatprep.subr.mxu0 0.0
    %1214 = vmatpush1.msra.mxu0 0.0
    %1215 = vmatprep.subr.mxu0 0.0
    %1216 = vmatpush1.msra.mxu0 0.0
    %1217 = vmatprep.subr.mxu0 0.0
    %1218 = vmatpush1.msra.mxu0 0.0
    %1219 = vmatprep.subr.mxu0 0.0
    %1220 = vmatpush1.msra.mxu0 0.0
    %1221 = vmatprep.subr.mxu0 0.0
    %1222 = vmatpush1.msra.mxu0 0.0
    %1223 = vmatprep.mubr.f32.mxu0 0.0
    %1224 = vmatmul.mubr.f32.gmra.mrb[0].mxu0 %v1157
    %v1225 = vpop.f32.mrb[0].mxu0
    %v1226 = vadd.f32 0.0, %v1225
    %v1227 = vpop.f32.mrb[0].mxu0
    %1228 = vdwg.mxu0
    %v1230 = vsel %vm767, %v853, 0
    %1232 = vmatprep.subr.mxu0 0.0
    %1233 = vmatpush1.msra.mxu0 %v99
    %1234 = vmatprep.subr.mxu0 0.0
    %1235 = vmatpush1.msra.mxu0 0.0
    %1236 = vmatprep.subr.mxu0 0.0
    %1237 = vmatpush1.msra.mxu0 0.0
    %1238 = vmatprep.subr.mxu0 0.0
    %1239 = vmatpush1.msra.mxu0 0.0
    %1240 = vmatprep.subr.mxu0 0.0
    %1241 = vmatpush1.msra.mxu0 0.0
    %1242 = vmatprep.subr.mxu0 0.0
    %1243 = vmatpush1.msra.mxu0 0.0
    %1244 = vmatprep.subr.mxu0 0.0
    %1245 = vmatpush1.msra.mxu0 0.0
    %1246 = vmatprep.subr.mxu0 0.0
    %1247 = vmatpush1.msra.mxu0 0.0
    %1248 = vmatprep.subr.mxu0 0.0
    %1249 = vmatpush1.msra.mxu0 0.0
    %1250 = vmatprep.subr.mxu0 0.0
    %1251 = vmatpush1.msra.mxu0 0.0
    %1252 = vmatprep.subr.mxu0 0.0
    %1253 = vmatpush1.msra.mxu0 0.0
    %1254 = vmatprep.subr.mxu0 0.0
    %1255 = vmatpush1.msra.mxu0 0.0
    %1256 = vmatprep.subr.mxu0 0.0
    %1257 = vmatpush1.msra.mxu0 0.0
    %1258 = vmatprep.subr.mxu0 0.0
    %1259 = vmatpush1.msra.mxu0 0.0
    %1260 = vmatprep.subr.mxu0 0.0
    %1261 = vmatpush1.msra.mxu0 0.0
    %1262 = vmatprep.subr.mxu0 0.0
    %1263 = vmatpush1.msra.mxu0 0.0
    %1264 = vmatprep.subr.mxu0 0.0
    %1265 = vmatpush1.msra.mxu0 0.0
    %1266 = vmatprep.subr.mxu0 0.0
    %1267 = vmatpush1.msra.mxu0 0.0
    %1268 = vmatprep.subr.mxu0 0.0
    %1269 = vmatpush1.msra.mxu0 0.0
    %1270 = vmatprep.subr.mxu0 0.0
    %1271 = vmatpush1.msra.mxu0 0.0
    %1272 = vmatprep.subr.mxu0 0.0
    %1273 = vmatpush1.msra.mxu0 0.0
    %1274 = vmatprep.subr.mxu0 0.0
    %1275 = vmatpush1.msra.mxu0 0.0
    %1276 = vmatprep.subr.mxu0 0.0
    %1277 = vmatpush1.msra.mxu0 0.0
    %1278 = vmatprep.subr.mxu0 0.0
    %1279 = vmatpush1.msra.mxu0 0.0
    %1280 = vmatprep.subr.mxu0 0.0
    %1281 = vmatpush1.msra.mxu0 0.0
    %1282 = vmatprep.subr.mxu0 0.0
    %1283 = vmatpush1.msra.mxu0 0.0
    %1284 = vmatprep.subr.mxu0 0.0
    %1285 = vmatpush1.msra.mxu0 0.0
    %1286 = vmatprep.subr.mxu0 0.0
    %1287 = vmatpush1.msra.mxu0 0.0
    %1288 = vmatprep.subr.mxu0 0.0
    %1289 = vmatpush1.msra.mxu0 0.0
    %1290 = vmatprep.subr.mxu0 0.0
    %1291 = vmatpush1.msra.mxu0 0.0
    %1292 = vmatprep.subr.mxu0 0.0
    %1293 = vmatpush1.msra.mxu0 0.0
    %1294 = vmatprep.subr.mxu0 0.0
    %1295 = vmatpush1.msra.mxu0 0.0
    %1296 = vmatprep.mubr.f32.mxu0 0.0
    %1297 = vmatmul.mubr.f32.gmra.mrb[0].mxu0 %v1230
    %v1298 = vpop.f32.mrb[0].mxu0
    %v1299 = vadd.f32 0.0, %v1298
    %v1300 = vpop.f32.mrb[0].mxu0
    %1301 = vdwg.mxu0
    %v1303 = vsel %vm767, %v854, 0
    %1305 = vmatprep.subr.mxu0 0.0
    %1306 = vmatpush1.msra.mxu0 %v100
    %1307 = vmatprep.subr.mxu0 0.0
    %1308 = vmatpush1.msra.mxu0 0.0
    %1309 = vmatprep.subr.mxu0 0.0
    %1310 = vmatpush1.msra.mxu0 0.0
    %1311 = vmatprep.subr.mxu0 0.0
    %1312 = vmatpush1.msra.mxu0 0.0
    %1313 = vmatprep.subr.mxu0 0.0
    %1314 = vmatpush1.msra.mxu0 0.0
    %1315 = vmatprep.subr.mxu0 0.0
    %1316 = vmatpush1.msra.mxu0 0.0
    %1317 = vmatprep.subr.mxu0 0.0
    %1318 = vmatpush1.msra.mxu0 0.0
    %1319 = vmatprep.subr.mxu0 0.0
    %1320 = vmatpush1.msra.mxu0 0.0
    %1321 = vmatprep.subr.mxu0 0.0
    %1322 = vmatpush1.msra.mxu0 0.0
    %1323 = vmatprep.subr.mxu0 0.0
    %1324 = vmatpush1.msra.mxu0 0.0
    %1325 = vmatprep.subr.mxu0 0.0
    %1326 = vmatpush1.msra.mxu0 0.0
    %1327 = vmatprep.subr.mxu0 0.0
    %1328 = vmatpush1.msra.mxu0 0.0
    %1329 = vmatprep.subr.mxu0 0.0
    %1330 = vmatpush1.msra.mxu0 0.0
    %1331 = vmatprep.subr.mxu0 0.0
    %1332 = vmatpush1.msra.mxu0 0.0
    %1333 = vmatprep.subr.mxu0 0.0
    %1334 = vmatpush1.msra.mxu0 0.0
    %1335 = vmatprep.subr.mxu0 0.0
    %1336 = vmatpush1.msra.mxu0 0.0
    %1337 = vmatprep.subr.mxu0 0.0
    %1338 = vmatpush1.msra.mxu0 0.0
    %1339 = vmatprep.subr.mxu0 0.0
    %1340 = vmatpush1.msra.mxu0 0.0
    %1341 = vmatprep.subr.mxu0 0.0
    %1342 = vmatpush1.msra.mxu0 0.0
    %1343 = vmatprep.subr.mxu0 0.0
    %1344 = vmatpush1.msra.mxu0 0.0
    %1345 = vmatprep.subr.mxu0 0.0
    %1346 = vmatpush1.msra.mxu0 0.0
    %1347 = vmatprep.subr.mxu0 0.0
    %1348 = vmatpush1.msra.mxu0 0.0
    %1349 = vmatprep.subr.mxu0 0.0
    %1350 = vmatpush1.msra.mxu0 0.0
    %1351 = vmatprep.subr.mxu0 0.0
    %1352 = vmatpush1.msra.mxu0 0.0
    %1353 = vmatprep.subr.mxu0 0.0
    %1354 = vmatpush1.msra.mxu0 0.0
    %1355 = vmatprep.subr.mxu0 0.0
    %1356 = vmatpush1.msra.mxu0 0.0
    %1357 = vmatprep.subr.mxu0 0.0
    %1358 = vmatpush1.msra.mxu0 0.0
    %1359 = vmatprep.subr.mxu0 0.0
    %1360 = vmatpush1.msra.mxu0 0.0
    %1361 = vmatprep.subr.mxu0 0.0
    %1362 = vmatpush1.msra.mxu0 0.0
    %1363 = vmatprep.subr.mxu0 0.0
    %1364 = vmatpush1.msra.mxu0 0.0
    %1365 = vmatprep.subr.mxu0 0.0
    %1366 = vmatpush1.msra.mxu0 0.0
    %1367 = vmatprep.subr.mxu0 0.0
    %1368 = vmatpush1.msra.mxu0 0.0
    %1369 = vmatprep.mubr.f32.mxu0 0.0
    %1370 = vmatmul.mubr.f32.gmra.mrb[0].mxu0 %v1303
    %v1371 = vpop.f32.mrb[0].mxu0
    %v1372 = vadd.f32 0.0, %v1371
    %v1373 = vpop.f32.mrb[0].mxu0
    %1374 = vdwg.mxu0
    %v1376 = vsel %vm767, %v855, 0
    %1378 = vmatprep.subr.mxu0 0.0
    %1379 = vmatpush1.msra.mxu0 %v101
    %1380 = vmatprep.subr.mxu0 0.0
    %1381 = vmatpush1.msra.mxu0 0.0
    %1382 = vmatprep.subr.mxu0 0.0
    %1383 = vmatpush1.msra.mxu0 0.0
    %1384 = vmatprep.subr.mxu0 0.0
    %1385 = vmatpush1.msra.mxu0 0.0
    %1386 = vmatprep.subr.mxu0 0.0
    %1387 = vmatpush1.msra.mxu0 0.0
    %1388 = vmatprep.subr.mxu0 0.0
    %1389 = vmatpush1.msra.mxu0 0.0
    %1390 = vmatprep.subr.mxu0 0.0
    %1391 = vmatpush1.msra.mxu0 0.0
    %1392 = vmatprep.subr.mxu0 0.0
    %1393 = vmatpush1.msra.mxu0 0.0
    %1394 = vmatprep.subr.mxu0 0.0
    %1395 = vmatpush1.msra.mxu0 0.0
    %1396 = vmatprep.subr.mxu0 0.0
    %1397 = vmatpush1.msra.mxu0 0.0
    %1398 = vmatprep.subr.mxu0 0.0
    %1399 = vmatpush1.msra.mxu0 0.0
    %1400 = vmatprep.subr.mxu0 0.0
    %1401 = vmatpush1.msra.mxu0 0.0
    %1402 = vmatprep.subr.mxu0 0.0
    %1403 = vmatpush1.msra.mxu0 0.0
    %1404 = vmatprep.subr.mxu0 0.0
    %1405 = vmatpush1.msra.mxu0 0.0
    %1406 = vmatprep.subr.mxu0 0.0
    %1407 = vmatpush1.msra.mxu0 0.0
    %1408 = vmatprep.subr.mxu0 0.0
    %1409 = vmatpush1.msra.mxu0 0.0
    %1410 = vmatprep.subr.mxu0 0.0
    %1411 = vmatpush1.msra.mxu0 0.0
    %1412 = vmatprep.subr.mxu0 0.0
    %1413 = vmatpush1.msra.mxu0 0.0
    %1414 = vmatprep.subr.mxu0 0.0
    %1415 = vmatpush1.msra.mxu0 0.0
    %1416 = vmatprep.subr.mxu0 0.0
    %1417 = vmatpush1.msra.mxu0 0.0
    %1418 = vmatprep.subr.mxu0 0.0
    %1419 = vmatpush1.msra.mxu0 0.0
    %1420 = vmatprep.subr.mxu0 0.0
    %1421 = vmatpush1.msra.mxu0 0.0
    %1422 = vmatprep.subr.mxu0 0.0
    %1423 = vmatpush1.msra.mxu0 0.0
    %1424 = vmatprep.subr.mxu0 0.0
    %1425 = vmatpush1.msra.mxu0 0.0
    %1426 = vmatprep.subr.mxu0 0.0
    %1427 = vmatpush1.msra.mxu0 0.0
    %1428 = vmatprep.subr.mxu0 0.0
    %1429 = vmatpush1.msra.mxu0 0.0
    %1430 = vmatprep.subr.mxu0 0.0
    %1431 = vmatpush1.msra.mxu0 0.0
    %1432 = vmatprep.subr.mxu0 0.0
    %1433 = vmatpush1.msra.mxu0 0.0
    %1434 = vmatprep.subr.mxu0 0.0
    %1435 = vmatpush1.msra.mxu0 0.0
    %1436 = vmatprep.subr.mxu0 0.0
    %1437 = vmatpush1.msra.mxu0 0.0
    %1438 = vmatprep.subr.mxu0 0.0
    %1439 = vmatpush1.msra.mxu0 0.0
    %1440 = vmatprep.subr.mxu0 0.0
    %1441 = vmatpush1.msra.mxu0 0.0
    %1442 = vmatprep.mubr.f32.mxu0 0.0
    %1443 = vmatmul.mubr.f32.gmra.mrb[0].mxu0 %v1376
    %v1444 = vpop.f32.mrb[0].mxu0
    %v1445 = vadd.f32 0.0, %v1444
    %v1446 = vpop.f32.mrb[0].mxu0
    %1447 = vdwg.mxu0
    %1448 = vst.msk [vmem:[#allocation10] sm:$0xff] %vm110, %v934
    %1449 = vst.msk [vmem:[#allocation10 + $0x8] sm:$0xff] %vm110, %v1007
    %1450 = vst.msk [vmem:[#allocation10 + $0x10] sm:$0xff] %vm110, %v1080
    %1451 = vst.msk [vmem:[#allocation10 + $0x18] sm:$0xff] %vm110, %v1153
    %1452 = vst.msk [vmem:[#allocation10 + $0x20] sm:$0xff] %vm110, %v1226
    %1453 = vst.msk [vmem:[#allocation10 + $0x28] sm:$0xff] %vm110, %v1299
    %1454 = vst.msk [vmem:[#allocation10 + $0x30] sm:$0xff] %vm110, %v1372
    %1455 = vst.msk [vmem:[#allocation10 + $0x38] sm:$0xff] %vm110, %v1445
    // Predicated region
    $region34: #{tpu_custom_call.1} parent=1 // pred_check
      _
    $region35: #{tpu_custom_call.1} parent=1 // pred_check_branch
      %1457 = sbr.rel (0) target = $region37
    $region36: #{tpu_custom_call.1} parent=1 // pred_region
      %s1459 = ssub.s32 1024, 1024
      %1460 = vsyncadd [#allocation4], %s1459
      %s1461 = sshll.u32 [#allocation10], 4
      %s1462 = int_to_ptr.vmem [resolvable:$true] %s1461
      %1467 = dma.vmem_to_hbm [thread:$0]  %s1462, 1024, %s4, [#allocation4], 128, 128, 8
    $region37: #{tpu_custom_call.1} parent=1 // pred_fallthru
      _
    // Predicated region
    $region38: #{tpu_custom_call.1} parent=1 // pred_check
      _
    $region39: #{tpu_custom_call.1} parent=1 // pred_check_branch
      %1469 = sbr.rel (0) target = $region41
    $region40: #{tpu_custom_call.1} parent=1 // pred_region
      %s1471 = ssub.s32 1024, 1024
      %1472 = vsyncadd [#allocation12], %s1471
      %s1473 = sshll.u32 [#allocation11], 4
      %s1474 = int_to_ptr.vmem [resolvable:$true] %s1473
      %1479 = dma.vmem_to_hbm [thread:$0]  %s1474, 1024, %s5, [#allocation12], 128, 128, 8
    $region41: #{tpu_custom_call.1} parent=1 // pred_fallthru
      _
    // Predicated region
    $region42: #{tpu_custom_call.1} parent=1 // pred_check
      _
    $region43: #{tpu_custom_call.1} parent=1 // pred_check_branch
      %1481 = sbr.rel (0) target = $region45
    $region44: #{tpu_custom_call.1} parent=1 // pred_region
      %1482 = dma.done [#allocation4], 1024
    $region45: #{tpu_custom_call.1} parent=1 // pred_fallthru
      _
    // Predicated region
    $region46: #{tpu_custom_call.1} parent=1 // pred_check
      _
    $region47: #{tpu_custom_call.1} parent=1 // pred_check_branch
      %1484 = sbr.rel (0) target = $region49
    $region48: #{tpu_custom_call.1} parent=1 // pred_region
      %1485 = dma.done [#allocation12], 1024
    $region49: #{tpu_custom_call.1} parent=1 // pred_fallthru
      _
    %1486 = vsyncpa [#allocation3], 1
    %1487 = vsyncpa [#allocation6], 1
    %1488 = vsyncpa [#allocation9], 1
    %1489 = vsyncpa [#allocation4], 1
    %1490 = vsyncpa [#allocation12], 1

</llo_original>
